<compile_context>
chip_gen: v6e
topology: v6e:2x2x1
jax: 0.10.0
libtpu: 0.0.40
codegen_flags: <defaults>
</compile_context>

<pallas_src>
import jax
import jax.numpy as jnp
import numpy as np
from jax.experimental import pallas as pl
from jax.experimental.pallas import tpu as pltpu


def _resblock_kernel(x_ref, w1_ref, w2_ref, out_ref):
    # x_ref / out_ref block: (1, H, W, C)
    # w*_ref:                (3, 3*C, C) bf16; [ky] -> rows ordered [kx, Cin]
    _, H, W, C = x_ref.shape
    HW = H * W
    eps = 1e-5

    # Column-edge masks for the width reflection; hoisted so they are built once
    # and shared by both convs (JAX does not CSE broadcast_in_dim in-body).
    colw = jax.lax.broadcasted_iota(jnp.int32, (W, C), 0)
    col = jnp.broadcast_to(colw[None, :, :], (H, W, C)).reshape(HW, C)
    is_left = col == 0           # x == 0     -> reflect x-1 to x+1
    is_right = col == W - 1      # x == W-1   -> reflect x+1 to x-1

    def shift_rows_down(t):
        # out[y] = t[y-1]; row 0 reflects to row 1 (reflect padding in H).
        return jnp.concatenate([t[W:2 * W], t[:(H - 1) * W]], axis=0)

    def shift_rows_up(t):
        # out[y] = t[y+1]; row H-1 reflects to row H-2.
        return jnp.concatenate([t[W:], t[(H - 2) * W:(H - 1) * W]], axis=0)

    def conv3x3(v, w_ref):
        """Reflect-padded 3x3 conv (no bias). v: (H*W, C) f32 -> (H*W, C) f32."""
        # Width taps via sublane roll (XLU) on the flattened rows + edge fix-up.
        prev = pltpu.roll(v, shift=1, axis=0)       # flat row r-1 (== in[y, x-1] for x >= 1)
        nxt = pltpu.roll(v, shift=HW - 1, axis=0)   # flat row r+1 (== in[y, x+1] for x <= W-2)
        left = jnp.where(is_left, nxt, prev)        # in[y, x-1] with reflection
        right = jnp.where(is_right, prev, nxt)      # in[y, x+1] with reflection
        # Single bf16 im2col slab: K axis ordered [kx=0 | kx=1 | kx=2] x Cin.
        a = jnp.concatenate([left.astype(jnp.bfloat16),
                             v.astype(jnp.bfloat16),
                             right.astype(jnp.bfloat16)], axis=-1)   # (HW, 3C)
        # Three K=3C matmuls against the SAME slab; apply the ky row shifts to the
        # (HW, C) f32 results (3x smaller than shifting the slab).
        mid = jnp.dot(a, w_ref[1], preferred_element_type=jnp.float32)   # ky = 1
        top = jnp.dot(a, w_ref[0], preferred_element_type=jnp.float32)   # ky = 0 contribution per source row
        bot = jnp.dot(a, w_ref[2], preferred_element_type=jnp.float32)   # ky = 2 contribution per source row
        return mid + shift_rows_down(top) + shift_rows_up(bot)

    def instance_norm(h):
        """Per-channel norm over spatial dims, single pass, biased variance."""
        inv_n = 1.0 / HW
        mean = jnp.sum(h, axis=0, keepdims=True) * inv_n
        ex2 = jnp.sum(h * h, axis=0, keepdims=True) * inv_n
        var = ex2 - mean * mean
        return (h - mean) * jax.lax.rsqrt(var + eps)

    # conv1 -> InstanceNorm -> ReLU   (conv bias dropped: cancelled by the IN mean)
    x0 = x_ref[0].astype(jnp.float32).reshape(HW, C)
    h = jnp.maximum(instance_norm(conv3x3(x0, w1_ref)), 0.0)
    # conv2 -> InstanceNorm
    h2 = instance_norm(conv3x3(h, w2_ref))
    # residual add: re-read the resident input block (keeps x0's live range short)
    out = x_ref[0].astype(jnp.float32).reshape(HW, C) + h2
    out_ref[0] = out.reshape(H, W, C).astype(out_ref.dtype)


@jax.jit
def residual_block_pallas(x_nchw, w1, b1, w2, b2):
    """x_nchw: (N, C, H, W); w*: (C, C, 3, 3) torch layout; b*: (C,)."""
    N, C, H, W = x_nchw.shape
    # InstanceNorm2d (affine=False) subtracts the per-channel mean, which cancels
    # the conv bias exactly -> biases are dead work and are not sent to the kernel.
    del b1, b2

    x_nhwc = jnp.transpose(x_nchw, (0, 2, 3, 1))  # (N, H, W, C)
    # (Cout, Cin, ky, kx) -> (ky, kx, Cin, Cout) -> (ky, 3*Cin, Cout), bf16 for the MXU
    w1_p = jnp.transpose(w1, (2, 3, 1, 0)).reshape(3, 3 * C, C).astype(jnp.bfloat16)
    w2_p = jnp.transpose(w2, (2, 3, 1, 0)).reshape(3, 3 * C, C).astype(jnp.bfloat16)

    out_nhwc = pl.pallas_call(
        _resblock_kernel,
        out_shape=jax.ShapeDtypeStruct((N, H, W, C), x_nchw.dtype),
        grid_spec=pltpu.PrefetchScalarGridSpec(
            num_scalar_prefetch=0,
            grid=(N,),
            in_specs=[
                pl.BlockSpec((1, H, W, C), lambda n: (n, 0, 0, 0)),
                pl.BlockSpec((3, 3 * C, C), lambda n: (0, 0, 0)),
                pl.BlockSpec((3, 3 * C, C), lambda n: (0, 0, 0)),
            ],
            out_specs=pl.BlockSpec((1, H, W, C), lambda n: (n, 0, 0, 0)),
        ),
        compiler_params=pltpu.CompilerParams(
            dimension_semantics=("parallel",),
            vmem_limit_bytes=64 * 1024 * 1024,
        ),
    )(x_nhwc, w1_p, w2_p)

    return jnp.transpose(out_nhwc, (0, 3, 1, 2))  # back to NCHW


def residual_block_ref(x, w1, b1, w2, b2):
    """Pure-JAX reference (NCHW), matching PyTorch semantics (f32, HIGHEST)."""
    eps = 1e-5

    def conv(v, w, b):
        vp = jnp.pad(v, ((0, 0), (0, 0), (1, 1), (1, 1)), mode="reflect")
        o = jax.lax.conv_general_dilated(
            vp, w, window_strides=(1, 1), padding="VALID",
            dimension_numbers=("NCHW", "OIHW", "NCHW"),
            precision=jax.lax.Precision.HIGHEST,
        )
        return o + b[None, :, None, None]

    def inorm(v):
        m = jnp.mean(v, axis=(2, 3), keepdims=True)
        d = v - m
        var = jnp.mean(d * d, axis=(2, 3), keepdims=True)
        return d * jax.lax.rsqrt(var + eps)

    h = jnp.maximum(inorm(conv(x, w1, b1)), 0.0)
    return x + inorm(conv(h, w2, b2))


if __name__ == "__main__":
    N, C, H, W = 2, 4, 16, 16

    key = jax.random.PRNGKey(0)
    kx, kw1, kb1, kw2, kb2 = jax.random.split(key, 5)

    x = jax.random.normal(kx, (N, C, H, W), dtype=jnp.float32)
    # deterministic synthetic parameters (shapes from nn.Conv2d(C, C, 3))
    w1 = 0.1 * jax.random.normal(kw1, (C, C, 3, 3), dtype=jnp.float32)
    b1 = 0.1 * jax.random.normal(kb1, (C,), dtype=jnp.float32)
    w2 = 0.1 * jax.random.normal(kw2, (C, C, 3, 3), dtype=jnp.float32)
    b2 = 0.1 * jax.random.normal(kb2, (C,), dtype=jnp.float32)

    out = jax.block_until_ready(residual_block_pallas(x, w1, b1, w2, b2))
    ref = jax.block_until_ready(residual_block_ref(x, w1, b1, w2, b2))

    # Kernel uses bf16 MXU operands (native MXU path) vs the f32-HIGHEST reference,
    # so the comparison tolerance is loosened accordingly; real structural bugs
    # (wrong tap / reflection) would produce O(1) errors and still be caught.
    np.testing.assert_allclose(np.asarray(out), np.asarray(ref), rtol=5e-2, atol=5e-2)

    print("KERNEL_OK")
</pallas_src>

<mosaic_0001>
module attributes {stable_mosaic.version = 11 : i64} {
  func.func @_resblock_kernel(%arg0: i32, %arg1: memref<1x16x16x4xf32, #tpu.memory_space<vmem>>, %arg2: memref<3x12x4xbf16, #tpu.memory_space<vmem>>, %arg3: memref<3x12x4xbf16, #tpu.memory_space<vmem>>, %arg4: memref<1x16x16x4xf32, #tpu.memory_space<vmem>>) attributes {dimension_semantics = [#tpu.dimension_semantics<parallel>], iteration_bounds = array<i64: 2>, scalar_prefetch = 0 : i64, scratch_operands = 0 : i64, tpu.core_type = #tpu.core_type<tc>, window_params = [{transform_indices = @transform_0, window_bounds = array<i64: 1, 16, 16, 4>}, {pipeline_mode = #tpu.pipeline_mode<synchronous>, transform_indices = @transform_1, window_bounds = array<i64: 3, 12, 4>}, {pipeline_mode = #tpu.pipeline_mode<synchronous>, transform_indices = @transform_2, window_bounds = array<i64: 3, 12, 4>}, {transform_indices = @transform_3, window_bounds = array<i64: 1, 16, 16, 4>}]} {
    %0 = tpu.iota {dimensions = array<i32: 0>} : vector<16x4xi32>
    %1 = vector.shape_cast %0 : vector<16x4xi32> to vector<1x16x4xi32>
    %2 = vector.shape_cast %1 : vector<1x16x4xi32> to vector<1x16x4xi32>
    %3 = vector.broadcast %2 : vector<1x16x4xi32> to vector<16x16x4xi32>
    %4 = vector.shape_cast %3 : vector<16x16x4xi32> to vector<256x4xi32>
    %c0_i32 = arith.constant 0 : i32
    %5 = vector.broadcast %c0_i32 : i32 to vector<256x4xi32>
    %6 = arith.cmpi eq, %4, %5 : vector<256x4xi32>
    %c15_i32 = arith.constant 15 : i32
    %7 = vector.broadcast %c15_i32 : i32 to vector<256x4xi32>
    %8 = arith.cmpi eq, %4, %7 : vector<256x4xi32>
    %c0 = arith.constant 0 : index
    %c0_0 = arith.constant 0 : index
    %c0_1 = arith.constant 0 : index
    %c0_2 = arith.constant 0 : index
    %9 = vector.load %arg1[%c0, %c0_0, %c0_1, %c0_2] : memref<1x16x16x4xf32, #tpu.memory_space<vmem>>, vector<1x16x16x4xf32>
    %10 = vector.shape_cast %9 : vector<1x16x16x4xf32> to vector<16x16x4xf32>
    %11 = vector.shape_cast %10 : vector<16x16x4xf32> to vector<256x4xf32>
    %c1_i32 = arith.constant 1 : i32
    %12 = tpu.dynamic_rotate %11 by %c1_i32 dim 0 : vector<256x4xf32>, i32 -> vector<256x4xf32>
    %c255_i32 = arith.constant 255 : i32
    %13 = tpu.dynamic_rotate %11 by %c255_i32 dim 0 : vector<256x4xf32>, i32 -> vector<256x4xf32>
    %14 = arith.select %6, %13, %12 : vector<256x4xi1>, vector<256x4xf32>
    %15 = arith.select %8, %12, %13 : vector<256x4xi1>, vector<256x4xf32>
    %16 = arith.truncf %14 : vector<256x4xf32> to vector<256x4xbf16>
    %17 = arith.truncf %11 : vector<256x4xf32> to vector<256x4xbf16>
    %18 = arith.truncf %15 : vector<256x4xf32> to vector<256x4xbf16>
    %19 = tpu.concatenate %16, %17, %18 in 1 : vector<256x4xbf16>, vector<256x4xbf16>, vector<256x4xbf16> -> vector<256x12xbf16>
    %c1 = arith.constant 1 : index
    %c0_3 = arith.constant 0 : index
    %c0_4 = arith.constant 0 : index
    %20 = vector.load %arg2[%c1, %c0_3, %c0_4] : memref<3x12x4xbf16, #tpu.memory_space<vmem>>, vector<1x12x4xbf16>
    %21 = vector.shape_cast %20 : vector<1x12x4xbf16> to vector<12x4xbf16>
    %cst = arith.constant dense<0.000000e+00> : vector<256x4xf32>
    %22 = tpu.matmul %19, %21, %cst {dimension_numbers = #tpu.dot_dimension_numbers<[1], [0], [0], [1], [0, 0, 1, 1], [], []>} : vector<256x12xbf16>, vector<12x4xbf16>, vector<256x4xf32> -> vector<256x4xf32>
    %c0_5 = arith.constant 0 : index
    %c0_6 = arith.constant 0 : index
    %c0_7 = arith.constant 0 : index
    %23 = vector.load %arg2[%c0_5, %c0_6, %c0_7] : memref<3x12x4xbf16, #tpu.memory_space<vmem>>, vector<1x12x4xbf16>
    %24 = vector.shape_cast %23 : vector<1x12x4xbf16> to vector<12x4xbf16>
    %cst_8 = arith.constant dense<0.000000e+00> : vector<256x4xf32>
    %25 = tpu.matmul %19, %24, %cst_8 {dimension_numbers = #tpu.dot_dimension_numbers<[1], [0], [0], [1], [0, 0, 1, 1], [], []>} : vector<256x12xbf16>, vector<12x4xbf16>, vector<256x4xf32> -> vector<256x4xf32>
    %c2 = arith.constant 2 : index
    %c0_9 = arith.constant 0 : index
    %c0_10 = arith.constant 0 : index
    %26 = vector.load %arg2[%c2, %c0_9, %c0_10] : memref<3x12x4xbf16, #tpu.memory_space<vmem>>, vector<1x12x4xbf16>
    %27 = vector.shape_cast %26 : vector<1x12x4xbf16> to vector<12x4xbf16>
    %cst_11 = arith.constant dense<0.000000e+00> : vector<256x4xf32>
    %28 = tpu.matmul %19, %27, %cst_11 {dimension_numbers = #tpu.dot_dimension_numbers<[1], [0], [0], [1], [0, 0, 1, 1], [], []>} : vector<256x12xbf16>, vector<12x4xbf16>, vector<256x4xf32> -> vector<256x4xf32>
    %29 = vector.extract_strided_slice %25 {offsets = [16, 0], sizes = [16, 4], strides = [1, 1]} : vector<256x4xf32> to vector<16x4xf32>
    %30 = vector.extract_strided_slice %25 {offsets = [0, 0], sizes = [240, 4], strides = [1, 1]} : vector<256x4xf32> to vector<240x4xf32>
    %31 = tpu.concatenate %29, %30 in 0 : vector<16x4xf32>, vector<240x4xf32> -> vector<256x4xf32>
    %32 = arith.addf %22, %31 : vector<256x4xf32>
    %33 = vector.extract_strided_slice %28 {offsets = [16, 0], sizes = [240, 4], strides = [1, 1]} : vector<256x4xf32> to vector<240x4xf32>
    %34 = vector.extract_strided_slice %28 {offsets = [224, 0], sizes = [16, 4], strides = [1, 1]} : vector<256x4xf32> to vector<16x4xf32>
    %35 = tpu.concatenate %33, %34 in 0 : vector<240x4xf32>, vector<16x4xf32> -> vector<256x4xf32>
    %36 = arith.addf %32, %35 : vector<256x4xf32>
    %cst_12 = arith.constant dense<0.000000e+00> : vector<4xf32>
    %37 = vector.multi_reduction <add>, %36, %cst_12 [0] : vector<256x4xf32> to vector<4xf32>
    %38 = vector.shape_cast %37 : vector<4xf32> to vector<1x4xf32>
    %cst_13 = arith.constant 3.906250e-03 : f32
    %39 = vector.broadcast %cst_13 : f32 to vector<1x4xf32>
    %40 = arith.mulf %38, %39 : vector<1x4xf32>
    %41 = arith.mulf %36, %36 : vector<256x4xf32>
    %cst_14 = arith.constant dense<0.000000e+00> : vector<4xf32>
    %42 = vector.multi_reduction <add>, %41, %cst_14 [0] : vector<256x4xf32> to vector<4xf32>
    %43 = vector.shape_cast %42 : vector<4xf32> to vector<1x4xf32>
    %cst_15 = arith.constant 3.906250e-03 : f32
    %44 = vector.broadcast %cst_15 : f32 to vector<1x4xf32>
    %45 = arith.mulf %43, %44 : vector<1x4xf32>
    %46 = arith.mulf %40, %40 : vector<1x4xf32>
    %47 = arith.subf %45, %46 : vector<1x4xf32>
    %48 = vector.broadcast %40 : vector<1x4xf32> to vector<256x4xf32>
    %49 = arith.subf %36, %48 : vector<256x4xf32>
    %cst_16 = arith.constant 9.99999974E-6 : f32
    %50 = vector.broadcast %cst_16 : f32 to vector<1x4xf32>
    %51 = arith.addf %47, %50 : vector<1x4xf32>
    %52 = math.rsqrt %51 : vector<1x4xf32>
    %53 = vector.broadcast %52 : vector<1x4xf32> to vector<256x4xf32>
    %54 = arith.mulf %49, %53 : vector<256x4xf32>
    %cst_17 = arith.constant 0.000000e+00 : f32
    %55 = vector.broadcast %cst_17 : f32 to vector<256x4xf32>
    %56 = arith.maximumf %54, %55 : vector<256x4xf32>
    %c1_i32_18 = arith.constant 1 : i32
    %57 = tpu.dynamic_rotate %56 by %c1_i32_18 dim 0 : vector<256x4xf32>, i32 -> vector<256x4xf32>
    %c255_i32_19 = arith.constant 255 : i32
    %58 = tpu.dynamic_rotate %56 by %c255_i32_19 dim 0 : vector<256x4xf32>, i32 -> vector<256x4xf32>
    %59 = arith.select %6, %58, %57 : vector<256x4xi1>, vector<256x4xf32>
    %60 = arith.select %8, %57, %58 : vector<256x4xi1>, vector<256x4xf32>
    %61 = arith.truncf %59 : vector<256x4xf32> to vector<256x4xbf16>
    %62 = arith.truncf %56 : vector<256x4xf32> to vector<256x4xbf16>
    %63 = arith.truncf %60 : vector<256x4xf32> to vector<256x4xbf16>
    %64 = tpu.concatenate %61, %62, %63 in 1 : vector<256x4xbf16>, vector<256x4xbf16>, vector<256x4xbf16> -> vector<256x12xbf16>
    %c1_20 = arith.constant 1 : index
    %c0_21 = arith.constant 0 : index
    %c0_22 = arith.constant 0 : index
    %65 = vector.load %arg3[%c1_20, %c0_21, %c0_22] : memref<3x12x4xbf16, #tpu.memory_space<vmem>>, vector<1x12x4xbf16>
    %66 = vector.shape_cast %65 : vector<1x12x4xbf16> to vector<12x4xbf16>
    %cst_23 = arith.constant dense<0.000000e+00> : vector<256x4xf32>
    %67 = tpu.matmul %64, %66, %cst_23 {dimension_numbers = #tpu.dot_dimension_numbers<[1], [0], [0], [1], [0, 0, 1, 1], [], []>} : vector<256x12xbf16>, vector<12x4xbf16>, vector<256x4xf32> -> vector<256x4xf32>
    %c0_24 = arith.constant 0 : index
    %c0_25 = arith.constant 0 : index
    %c0_26 = arith.constant 0 : index
    %68 = vector.load %arg3[%c0_24, %c0_25, %c0_26] : memref<3x12x4xbf16, #tpu.memory_space<vmem>>, vector<1x12x4xbf16>
    %69 = vector.shape_cast %68 : vector<1x12x4xbf16> to vector<12x4xbf16>
    %cst_27 = arith.constant dense<0.000000e+00> : vector<256x4xf32>
    %70 = tpu.matmul %64, %69, %cst_27 {dimension_numbers = #tpu.dot_dimension_numbers<[1], [0], [0], [1], [0, 0, 1, 1], [], []>} : vector<256x12xbf16>, vector<12x4xbf16>, vector<256x4xf32> -> vector<256x4xf32>
    %c2_28 = arith.constant 2 : index
    %c0_29 = arith.constant 0 : index
    %c0_30 = arith.constant 0 : index
    %71 = vector.load %arg3[%c2_28, %c0_29, %c0_30] : memref<3x12x4xbf16, #tpu.memory_space<vmem>>, vector<1x12x4xbf16>
    %72 = vector.shape_cast %71 : vector<1x12x4xbf16> to vector<12x4xbf16>
    %cst_31 = arith.constant dense<0.000000e+00> : vector<256x4xf32>
    %73 = tpu.matmul %64, %72, %cst_31 {dimension_numbers = #tpu.dot_dimension_numbers<[1], [0], [0], [1], [0, 0, 1, 1], [], []>} : vector<256x12xbf16>, vector<12x4xbf16>, vector<256x4xf32> -> vector<256x4xf32>
    %74 = vector.extract_strided_slice %70 {offsets = [16, 0], sizes = [16, 4], strides = [1, 1]} : vector<256x4xf32> to vector<16x4xf32>
    %75 = vector.extract_strided_slice %70 {offsets = [0, 0], sizes = [240, 4], strides = [1, 1]} : vector<256x4xf32> to vector<240x4xf32>
    %76 = tpu.concatenate %74, %75 in 0 : vector<16x4xf32>, vector<240x4xf32> -> vector<256x4xf32>
    %77 = arith.addf %67, %76 : vector<256x4xf32>
    %78 = vector.extract_strided_slice %73 {offsets = [16, 0], sizes = [240, 4], strides = [1, 1]} : vector<256x4xf32> to vector<240x4xf32>
    %79 = vector.extract_strided_slice %73 {offsets = [224, 0], sizes = [16, 4], strides = [1, 1]} : vector<256x4xf32> to vector<16x4xf32>
    %80 = tpu.concatenate %78, %79 in 0 : vector<240x4xf32>, vector<16x4xf32> -> vector<256x4xf32>
    %81 = arith.addf %77, %80 : vector<256x4xf32>
    %cst_32 = arith.constant dense<0.000000e+00> : vector<4xf32>
    %82 = vector.multi_reduction <add>, %81, %cst_32 [0] : vector<256x4xf32> to vector<4xf32>
    %83 = vector.shape_cast %82 : vector<4xf32> to vector<1x4xf32>
    %cst_33 = arith.constant 3.906250e-03 : f32
    %84 = vector.broadcast %cst_33 : f32 to vector<1x4xf32>
    %85 = arith.mulf %83, %84 : vector<1x4xf32>
    %86 = arith.mulf %81, %81 : vector<256x4xf32>
    %cst_34 = arith.constant dense<0.000000e+00> : vector<4xf32>
    %87 = vector.multi_reduction <add>, %86, %cst_34 [0] : vector<256x4xf32> to vector<4xf32>
    %88 = vector.shape_cast %87 : vector<4xf32> to vector<1x4xf32>
    %cst_35 = arith.constant 3.906250e-03 : f32
    %89 = vector.broadcast %cst_35 : f32 to vector<1x4xf32>
    %90 = arith.mulf %88, %89 : vector<1x4xf32>
    %91 = arith.mulf %85, %85 : vector<1x4xf32>
    %92 = arith.subf %90, %91 : vector<1x4xf32>
    %93 = vector.broadcast %85 : vector<1x4xf32> to vector<256x4xf32>
    %94 = arith.subf %81, %93 : vector<256x4xf32>
    %cst_36 = arith.constant 9.99999974E-6 : f32
    %95 = vector.broadcast %cst_36 : f32 to vector<1x4xf32>
    %96 = arith.addf %92, %95 : vector<1x4xf32>
    %97 = math.rsqrt %96 : vector<1x4xf32>
    %98 = vector.broadcast %97 : vector<1x4xf32> to vector<256x4xf32>
    %99 = arith.mulf %94, %98 : vector<256x4xf32>
    %c0_37 = arith.constant 0 : index
    %c0_38 = arith.constant 0 : index
    %c0_39 = arith.constant 0 : index
    %c0_40 = arith.constant 0 : index
    %100 = vector.load %arg1[%c0_37, %c0_38, %c0_39, %c0_40] : memref<1x16x16x4xf32, #tpu.memory_space<vmem>>, vector<1x16x16x4xf32>
    %101 = vector.shape_cast %100 : vector<1x16x16x4xf32> to vector<16x16x4xf32>
    %102 = vector.shape_cast %101 : vector<16x16x4xf32> to vector<256x4xf32>
    %103 = arith.addf %102, %99 : vector<256x4xf32>
    %104 = vector.shape_cast %103 : vector<256x4xf32> to vector<16x16x4xf32>
    %c0_41 = arith.constant 0 : index
    %c0_42 = arith.constant 0 : index
    %c0_43 = arith.constant 0 : index
    %c0_44 = arith.constant 0 : index
    %105 = vector.load %arg4[%c0_41, %c0_42, %c0_43, %c0_44] : memref<1x16x16x4xf32, #tpu.memory_space<vmem>>, vector<1x16x16x4xf32>
    %106 = vector.shape_cast %105 : vector<1x16x16x4xf32> to vector<16x16x4xf32>
    %107 = vector.shape_cast %104 : vector<16x16x4xf32> to vector<1x16x16x4xf32>
    tpu.vector_store %arg4[%c0_41, %c0_42, %c0_43, %c0_44], %107 {strides = array<i32>} : memref<1x16x16x4xf32, #tpu.memory_space<vmem>>, vector<1x16x16x4xf32>,
    return
  }
  func.func @transform_0(%arg0: i32) -> (i32, i32, i32, i32) {
    %c0_i32 = arith.constant 0 : i32
    %c0_i32_0 = arith.constant 0 : i32
    %c0_i32_1 = arith.constant 0 : i32
    %c0_i32_2 = arith.constant 0 : i32
    return %arg0, %c0_i32, %c0_i32_0, %c0_i32_1 : i32, i32, i32, i32
  }
  func.func @transform_1(%arg0: i32) -> (i32, i32, i32) {
    %c0_i32 = arith.constant 0 : i32
    %c0_i32_0 = arith.constant 0 : i32
    %c0_i32_1 = arith.constant 0 : i32
    %c0_i32_2 = arith.constant 0 : i32
    return %c0_i32, %c0_i32_0, %c0_i32_1 : i32, i32, i32
  }
  func.func @transform_2(%arg0: i32) -> (i32, i32, i32) {
    %c0_i32 = arith.constant 0 : i32
    %c0_i32_0 = arith.constant 0 : i32
    %c0_i32_1 = arith.constant 0 : i32
    %c0_i32_2 = arith.constant 0 : i32
    return %c0_i32, %c0_i32_0, %c0_i32_1 : i32, i32, i32
  }
  func.func @transform_3(%arg0: i32) -> (i32, i32, i32, i32) {
    %c0_i32 = arith.constant 0 : i32
    %c0_i32_0 = arith.constant 0 : i32
    %c0_i32_1 = arith.constant 0 : i32
    %c0_i32_2 = arith.constant 0 : i32
    return %arg0, %c0_i32, %c0_i32_0, %c0_i32_1 : i32, i32, i32, i32
  }
}

</mosaic_0001>

<llo_original>
// kernel: residual_block_pallas.1
$region0: #{residual_block_pallas.1}
  #allocation0 [shape = 'u32[]', space=smem, size = 0x4, offset = 0x4, fixed_abs, tag = 'smem constant byte address 0x4 - core index']
  #allocation1 [shape = 'u32[144,128]{1,0:T(1,128)}', space=vmem, size = 0x12000, scoped, tag = 'internal scratch']
  %s0 = inlined_call_operand.vmem [shape: f32[2,16,16,4], index: 0, kind: input, shape index: {}]
  %s1 = inlined_call_operand.vmem [shape: bf16[3,12,4], index: 1, kind: input, shape index: {}]
  %s2 = inlined_call_operand.vmem [shape: bf16[3,12,4], index: 2, kind: input, shape index: {}]
  %s3 = inlined_call_operand.vmem [shape: f32[2,16,16,4], index: 3, kind: output, shape index: {}]
  %s4 = sld [smem:[#allocation0]]
  $region45: #{residual_block_pallas.1} parent=0
    _
  %s6 = ssub.s32 1, %s4
  %s7 = scalar_select 0, %s6, %s4
  loop: start=0, step=1, limit=4
  $region2: #{residual_block_pallas.1} parent=0 // loop_pre_header
    _
  $region3: #{residual_block_pallas.1} parent=0 // loop_header
    %s9 = sphi 0, %s13
    %p10 = scmp.ge.s32.totalorder %s9, 4
    %s19 = sphi 0, %s21
    %s22 = sphi 0, %s19
    %s23 = sphi 0, %s22
    %s39 = sphi 0, %s23
    %s43 = sphi 0, %s43
    %s45 = sphi 0, %s43
    %s46 = sphi 0, %s45
    %s60 = sphi 0, %s46
    %s64 = sphi 0, %s64
    %s66 = sphi 0, %s64
    %s67 = sphi 0, %s66
    %s81 = sphi 0, %s67
    %s87 = sphi 0, %s89
    %s90 = sphi 0, %s87
    %s91 = sphi 0, %s90
    %s107 = sphi 0, %s91
  $region4: #{residual_block_pallas.1} parent=0 // loop_header_branch
    %12 = sbr.rel (%p10) target = $region8
  $region5: #{residual_block_pallas.1} parent=0 // loop_body
    %s14 = ssub.s32 %s9, 1
    %s15 = ssub.s32 %s9, 2
    %s16 = sadd.s32 %s9, 1
    %s17 = ssub.s32 %s9, %s16
    %p18 = scmp.eq.s32.totalorder %s17, 0
    %s20 = sadd.s32 %s19, 1
    %s21 = scalar_select %p18, %s19, %s20
    %p24 = pneg %p18
    %p25 = scmp.eq.s32.totalorder %s9, 1
    %p26 = por %p24, %p25
    %p27 = scmp.ne.s32.totalorder %s19, %s22
    %p28 = scmp.eq.s32.totalorder %s9, 0
    %p29 = por %p27, %p28
    %p30 = scmp.ne.s32.totalorder %s19, %s22
    %p31 = scmp.eq.s32.totalorder %s14, 1
    %p32 = por %p30, %p31
    %p33 = scmp.ne.s32.totalorder %s22, %s23
    %p34 = scmp.eq.s32.totalorder %s14, 0
    %p35 = por %p33, %p34
    %p36 = scmp.ne.s32.totalorder %s22, %s23
    %p37 = scmp.eq.s32.totalorder %s15, 1
    %p38 = por %p36, %p37
    %p40 = scmp.ne.s32.totalorder %s23, %s39
    %p41 = scmp.eq.s32.totalorder %s15, 0
    %p42 = por %p40, %p41
    %s44 = sadd.s32 %s43, 1
    %p47 = scmp.eq.s32.totalorder %s9, 1
    %p48 = scmp.ne.s32.totalorder %s43, %s45
    %p49 = scmp.eq.s32.totalorder %s9, 0
    %p50 = por %p48, %p49
    %p51 = scmp.ne.s32.totalorder %s43, %s45
    %p52 = scmp.eq.s32.totalorder %s14, 1
    %p53 = por %p51, %p52
    %p54 = scmp.ne.s32.totalorder %s45, %s46
    %p55 = scmp.eq.s32.totalorder %s14, 0
    %p56 = por %p54, %p55
    %p57 = scmp.ne.s32.totalorder %s45, %s46
    %p58 = scmp.eq.s32.totalorder %s15, 1
    %p59 = por %p57, %p58
    %p61 = scmp.ne.s32.totalorder %s46, %s60
    %p62 = scmp.eq.s32.totalorder %s15, 0
    %p63 = por %p61, %p62
    %s65 = sadd.s32 %s64, 1
    %p68 = scmp.eq.s32.totalorder %s9, 1
    %p69 = scmp.ne.s32.totalorder %s64, %s66
    %p70 = scmp.eq.s32.totalorder %s9, 0
    %p71 = por %p69, %p70
    %p72 = scmp.ne.s32.totalorder %s64, %s66
    %p73 = scmp.eq.s32.totalorder %s14, 1
    %p74 = por %p72, %p73
    %p75 = scmp.ne.s32.totalorder %s66, %s67
    %p76 = scmp.eq.s32.totalorder %s14, 0
    %p77 = por %p75, %p76
    %p78 = scmp.ne.s32.totalorder %s66, %s67
    %p79 = scmp.eq.s32.totalorder %s15, 1
    %p80 = por %p78, %p79
    %p82 = scmp.ne.s32.totalorder %s67, %s81
    %p83 = scmp.eq.s32.totalorder %s15, 0
    %p84 = por %p82, %p83
    %s85 = ssub.s32 %s9, %s16
    %p86 = scmp.eq.s32.totalorder %s85, 0
    %s88 = sadd.s32 %s87, 1
    %s89 = scalar_select %p86, %s87, %s88
    %p92 = pneg %p86
    %p93 = scmp.eq.s32.totalorder %s9, 1
    %p94 = por %p92, %p93
    %p95 = scmp.ne.s32.totalorder %s87, %s90
    %p96 = scmp.eq.s32.totalorder %s9, 0
    %p97 = por %p95, %p96
    %p98 = scmp.ne.s32.totalorder %s87, %s90
    %p99 = scmp.eq.s32.totalorder %s14, 1
    %p100 = por %p98, %p99
    %p101 = scmp.ne.s32.totalorder %s90, %s91
    %p102 = scmp.eq.s32.totalorder %s14, 0
    %p103 = por %p101, %p102
    %p104 = scmp.ne.s32.totalorder %s90, %s91
    %p105 = scmp.eq.s32.totalorder %s15, 1
    %p106 = por %p104, %p105
    %p108 = scmp.ne.s32.totalorder %s91, %s107
    %p109 = scmp.eq.s32.totalorder %s15, 0
    %p110 = por %p108, %p109
    %p111 = scmp.le.s32.totalorder 1, %s9
    %p112 = scmp.lt.s32.totalorder %s9, 3
    %p113 = pnand %p111, %p112
    %p114 = pneg %p113
    // Predicated region
    $region9: #{residual_block_pallas.1} parent=5 // pred_check
      _
    $region10: #{residual_block_pallas.1} parent=5 // pred_check_branch
      %116 = sbr.rel (%p113) target = $region12
    $region11: #{residual_block_pallas.1} parent=5 // pred_region
      %s117 = ssub.s32 %s9, 1
      // Predicated region
      $region13: #{residual_block_pallas.1} parent=11 // pred_check
        %p118 = pneg %p56
      $region14: #{residual_block_pallas.1} parent=11 // pred_check_branch
        %120 = sbr.rel (%p118) target = $region16
      $region15: #{residual_block_pallas.1} parent=11 // pred_region
        _
      $region16: #{residual_block_pallas.1} parent=11 // pred_fallthru
        _
      // Predicated region
      $region17: #{residual_block_pallas.1} parent=11 // pred_check
        %p121 = pneg %p77
      $region18: #{residual_block_pallas.1} parent=11 // pred_check_branch
        %123 = sbr.rel (%p121) target = $region20
      $region19: #{residual_block_pallas.1} parent=11 // pred_region
        _
      $region20: #{residual_block_pallas.1} parent=11 // pred_fallthru
        _
    $region12: #{residual_block_pallas.1} parent=5 // pred_fallthru
      _
    %p124 = scmp.lt.s32.totalorder %s9, 2
    // Predicated region
    $region21: #{residual_block_pallas.1} parent=5 // pred_check
      %p125 = pneg %p124
    $region22: #{residual_block_pallas.1} parent=5 // pred_check_branch
      %127 = sbr.rel (%p125) target = $region24
    $region23: #{residual_block_pallas.1} parent=5 // pred_region
      // Predicated region
      $region25: #{residual_block_pallas.1} parent=23 // pred_check
        %p128 = pneg %p29
      $region26: #{residual_block_pallas.1} parent=23 // pred_check_branch
        %130 = sbr.rel (%p128) target = $region28
      $region27: #{residual_block_pallas.1} parent=23 // pred_region
        %p131 = scmp.lt.s32.totalorder %s9, 1
        %s132 = scalar_select %p131, %s9, 1
        %s133 = smul.addr %s132, 32
        %s134 = smul.addr %s133, 8
        %s135 = scalar_lea.vmem %s0, %s134
      $region28: #{residual_block_pallas.1} parent=23 // pred_fallthru
        _
    $region24: #{residual_block_pallas.1} parent=5 // pred_fallthru
      _
    %p136 = scmp.le.s32.totalorder 1, %s9
    %p137 = scmp.lt.s32.totalorder %s9, 3
    %p138 = pnand %p136, %p137
    %p139 = pneg %p138
    // Predicated region
    $region29: #{residual_block_pallas.1} parent=5 // pred_check
      _
    $region30: #{residual_block_pallas.1} parent=5 // pred_check_branch
      %141 = sbr.rel (%p138) target = $region32
    $region31: #{residual_block_pallas.1} parent=5 // pred_region
      %s142 = ssub.s32 %s9, 1
      %p143 = scmp.lt.s32.totalorder %s14, 1
      %s144 = scalar_select %p143, %s14, 1
      %s145 = smul.addr %s144, 32
      %s146 = smul.addr %s145, 8
      %s147 = scalar_lea.vmem %s0, %s146
      %p148 = pneg %p35
      %p149 = pneg %p32
      %p150 = pneg %p56
      %p151 = pneg %p53
      %p152 = pneg %p77
      %p153 = pneg %p74
      %p154 = pneg %p103
      %p155 = pneg %p100
      %p156 = scmp.lt.s32.totalorder %s14, 1
      %s157 = scalar_select %p156, %s14, 1
      %s158 = smul.addr %s157, 32
      %s159 = smul.addr %s158, 8
      %s160 = scalar_lea.vmem %s3, %s159
      %p161 = scmp.lt.s32.totalorder %s14, 1
      %s162 = scalar_select %p161, %s14, 1
      %s163 = smul.addr %s162, 32
      %s164 = smul.addr %s163, 8
      %s165 = scalar_lea.vmem %s0, %s164
      %p166 = scmp.lt.s32.totalorder %s14, 1
      %s167 = scalar_select %p166, %s14, 1
      %s168 = smul.addr %s167, 32
      %s169 = smul.addr %s168, 8
      %s170 = scalar_lea.vmem %s3, %s169
      %v172 = vlaneseq
      %v173 = vshrl.u32 %v172, 7
      %v174 = vadd.s32 %v173, 8
      %vm175 = vcmp.eq.s32.totalorder %v173, 0
      %vm176 = vcmp.eq.s32.totalorder %v174, 0
      %vm177 = vcmp.eq.s32.totalorder %v173, 15
      %vm178 = vcmp.eq.s32.totalorder %v174, 15
      %v179 = vld [vmem:[%s165] sm:$0xff]
      %v180 = vld [vmem:[%s165 + $0x8] sm:$0xff]
      %v181 = vld [vmem:[%s165 + $0x10] sm:$0xff]
      %v182 = vld [vmem:[%s165 + $0x18] sm:$0xff]
      %v183 = vld [vmem:[%s165 + $0x20] sm:$0xff]
      %v184 = vld [vmem:[%s165 + $0x28] sm:$0xff]
      %v185 = vld [vmem:[%s165 + $0x30] sm:$0xff]
      %v186 = vld [vmem:[%s165 + $0x38] sm:$0xff]
      %v187 = vld [vmem:[%s165 + $0x40] sm:$0xff]
      %v188 = vld [vmem:[%s165 + $0x48] sm:$0xff]
      %v189 = vld [vmem:[%s165 + $0x50] sm:$0xff]
      %v190 = vld [vmem:[%s165 + $0x58] sm:$0xff]
      %v191 = vld [vmem:[%s165 + $0x60] sm:$0xff]
      %v192 = vld [vmem:[%s165 + $0x68] sm:$0xff]
      %v193 = vld [vmem:[%s165 + $0x70] sm:$0xff]
      %v194 = vld [vmem:[%s165 + $0x78] sm:$0xff]
      %v195 = vld [vmem:[%s165 + $0x80] sm:$0xff]
      %v196 = vld [vmem:[%s165 + $0x88] sm:$0xff]
      %v197 = vld [vmem:[%s165 + $0x90] sm:$0xff]
      %v198 = vld [vmem:[%s165 + $0x98] sm:$0xff]
      %v199 = vld [vmem:[%s165 + $0xa0] sm:$0xff]
      %v200 = vld [vmem:[%s165 + $0xa8] sm:$0xff]
      %v201 = vld [vmem:[%s165 + $0xb0] sm:$0xff]
      %v202 = vld [vmem:[%s165 + $0xb8] sm:$0xff]
      %v203 = vld [vmem:[%s165 + $0xc0] sm:$0xff]
      %v204 = vld [vmem:[%s165 + $0xc8] sm:$0xff]
      %v205 = vld [vmem:[%s165 + $0xd0] sm:$0xff]
      %v206 = vld [vmem:[%s165 + $0xd8] sm:$0xff]
      %v207 = vld [vmem:[%s165 + $0xe0] sm:$0xff]
      %v208 = vld [vmem:[%s165 + $0xe8] sm:$0xff]
      %v209 = vld [vmem:[%s165 + $0xf0] sm:$0xff]
      %v210 = vld [vmem:[%s165 + $0xf8] sm:$0xff]
      %v211 = vrot.slane %v179, 7
      %v212 = vrot.slane %v180, 7
      %v213 = vrot.slane %v181, 7
      %v214 = vrot.slane %v182, 7
      %v215 = vrot.slane %v183, 7
      %v216 = vrot.slane %v184, 7
      %v217 = vrot.slane %v185, 7
      %v218 = vrot.slane %v186, 7
      %v219 = vrot.slane %v187, 7
      %v220 = vrot.slane %v188, 7
      %v221 = vrot.slane %v189, 7
      %v222 = vrot.slane %v190, 7
      %v223 = vrot.slane %v191, 7
      %v224 = vrot.slane %v192, 7
      %v225 = vrot.slane %v193, 7
      %v226 = vrot.slane %v194, 7
      %v227 = vrot.slane %v195, 7
      %v228 = vrot.slane %v196, 7
      %v229 = vrot.slane %v197, 7
      %v230 = vrot.slane %v198, 7
      %v231 = vrot.slane %v199, 7
      %v232 = vrot.slane %v200, 7
      %v233 = vrot.slane %v201, 7
      %v234 = vrot.slane %v202, 7
      %v235 = vrot.slane %v203, 7
      %v236 = vrot.slane %v204, 7
      %v237 = vrot.slane %v205, 7
      %v238 = vrot.slane %v206, 7
      %v239 = vrot.slane %v207, 7
      %v240 = vrot.slane %v208, 7
      %v241 = vrot.slane %v209, 7
      %v242 = vrot.slane %v210, 7
      %vm243 = vcmp.lt.s32.totalorder %v173, 1
      %v244 = vsel %vm243, %v241, %v242
      %v245 = vsel %vm243, %v240, %v241
      %v246 = vsel %vm243, %v239, %v240
      %v247 = vsel %vm243, %v238, %v239
      %v248 = vsel %vm243, %v237, %v238
      %v249 = vsel %vm243, %v236, %v237
      %v250 = vsel %vm243, %v235, %v236
      %v251 = vsel %vm243, %v234, %v235
      %v252 = vsel %vm243, %v233, %v234
      %v253 = vsel %vm243, %v232, %v233
      %v254 = vsel %vm243, %v231, %v232
      %v255 = vsel %vm243, %v230, %v231
      %v256 = vsel %vm243, %v229, %v230
      %v257 = vsel %vm243, %v228, %v229
      %v258 = vsel %vm243, %v227, %v228
      %v259 = vsel %vm243, %v226, %v227
      %v260 = vsel %vm243, %v225, %v226
      %v261 = vsel %vm243, %v224, %v225
      %v262 = vsel %vm243, %v223, %v224
      %v263 = vsel %vm243, %v222, %v223
      %v264 = vsel %vm243, %v221, %v222
      %v265 = vsel %vm243, %v220, %v221
      %v266 = vsel %vm243, %v219, %v220
      %v267 = vsel %vm243, %v218, %v219
      %v268 = vsel %vm243, %v217, %v218
      %v269 = vsel %vm243, %v216, %v217
      %v270 = vsel %vm243, %v215, %v216
      %v271 = vsel %vm243, %v214, %v215
      %v272 = vsel %vm243, %v213, %v214
      %v273 = vsel %vm243, %v212, %v213
      %v274 = vsel %vm243, %v211, %v212
      %v275 = vsel %vm243, %v242, %v211
      %v276 = vrot.slane %v179, 1
      %v277 = vrot.slane %v180, 1
      %v278 = vrot.slane %v181, 1
      %v279 = vrot.slane %v182, 1
      %v280 = vrot.slane %v183, 1
      %v281 = vrot.slane %v184, 1
      %v282 = vrot.slane %v185, 1
      %v283 = vrot.slane %v186, 1
      %v284 = vrot.slane %v187, 1
      %v285 = vrot.slane %v188, 1
      %v286 = vrot.slane %v189, 1
      %v287 = vrot.slane %v190, 1
      %v288 = vrot.slane %v191, 1
      %v289 = vrot.slane %v192, 1
      %v290 = vrot.slane %v193, 1
      %v291 = vrot.slane %v194, 1
      %v292 = vrot.slane %v195, 1
      %v293 = vrot.slane %v196, 1
      %v294 = vrot.slane %v197, 1
      %v295 = vrot.slane %v198, 1
      %v296 = vrot.slane %v199, 1
      %v297 = vrot.slane %v200, 1
      %v298 = vrot.slane %v201, 1
      %v299 = vrot.slane %v202, 1
      %v300 = vrot.slane %v203, 1
      %v301 = vrot.slane %v204, 1
      %v302 = vrot.slane %v205, 1
      %v303 = vrot.slane %v206, 1
      %v304 = vrot.slane %v207, 1
      %v305 = vrot.slane %v208, 1
      %v306 = vrot.slane %v209, 1
      %v307 = vrot.slane %v210, 1
      %vm308 = vcmp.lt.s32.totalorder %v173, 7
      %v309 = vsel %vm308, %v306, %v307
      %v310 = vsel %vm308, %v305, %v306
      %v311 = vsel %vm308, %v304, %v305
      %v312 = vsel %vm308, %v303, %v304
      %v313 = vsel %vm308, %v302, %v303
      %v314 = vsel %vm308, %v301, %v302
      %v315 = vsel %vm308, %v300, %v301
      %v316 = vsel %vm308, %v299, %v300
      %v317 = vsel %vm308, %v298, %v299
      %v318 = vsel %vm308, %v297, %v298
      %v319 = vsel %vm308, %v296, %v297
      %v320 = vsel %vm308, %v295, %v296
      %v321 = vsel %vm308, %v294, %v295
      %v322 = vsel %vm308, %v293, %v294
      %v323 = vsel %vm308, %v292, %v293
      %v324 = vsel %vm308, %v291, %v292
      %v325 = vsel %vm308, %v290, %v291
      %v326 = vsel %vm308, %v289, %v290
      %v327 = vsel %vm308, %v288, %v289
      %v328 = vsel %vm308, %v287, %v288
      %v329 = vsel %vm308, %v286, %v287
      %v330 = vsel %vm308, %v285, %v286
      %v331 = vsel %vm308, %v284, %v285
      %v332 = vsel %vm308, %v283, %v284
      %v333 = vsel %vm308, %v282, %v283
      %v334 = vsel %vm308, %v281, %v282
      %v335 = vsel %vm308, %v280, %v281
      %v336 = vsel %vm308, %v279, %v280
      %v337 = vsel %vm308, %v278, %v279
      %v338 = vsel %vm308, %v277, %v278
      %v339 = vsel %vm308, %v276, %v277
      %v340 = vsel %vm308, %v307, %v276
      %v341 = vsel %vm175, %v339, %v275
      %v342 = vsel %vm176, %v338, %v274
      %v343 = vsel %vm175, %v337, %v273
      %v344 = vsel %vm176, %v336, %v272
      %v345 = vsel %vm175, %v335, %v271
      %v346 = vsel %vm176, %v334, %v270
      %v347 = vsel %vm175, %v333, %v269
      %v348 = vsel %vm176, %v332, %v268
      %v349 = vsel %vm175, %v331, %v267
      %v350 = vsel %vm176, %v330, %v266
      %v351 = vsel %vm175, %v329, %v265
      %v352 = vsel %vm176, %v328, %v264
      %v353 = vsel %vm175, %v327, %v263
      %v354 = vsel %vm176, %v326, %v262
      %v355 = vsel %vm175, %v325, %v261
      %v356 = vsel %vm176, %v324, %v260
      %v357 = vsel %vm175, %v323, %v259
      %v358 = vsel %vm176, %v322, %v258
      %v359 = vsel %vm175, %v321, %v257
      %v360 = vsel %vm176, %v320, %v256
      %v361 = vsel %vm175, %v319, %v255
      %v362 = vsel %vm176, %v318, %v254
      %v363 = vsel %vm175, %v317, %v253
      %v364 = vsel %vm176, %v316, %v252
      %v365 = vsel %vm175, %v315, %v251
      %v366 = vsel %vm176, %v314, %v250
      %v367 = vsel %vm175, %v313, %v249
      %v368 = vsel %vm176, %v312, %v248
      %v369 = vsel %vm175, %v311, %v247
      %v370 = vsel %vm176, %v310, %v246
      %v371 = vsel %vm175, %v309, %v245
      %v372 = vsel %vm176, %v340, %v244
      %v373 = vsel %vm177, %v275, %v339
      %v374 = vsel %vm178, %v274, %v338
      %v375 = vsel %vm177, %v273, %v337
      %v376 = vsel %vm178, %v272, %v336
      %v377 = vsel %vm177, %v271, %v335
      %v378 = vsel %vm178, %v270, %v334
      %v379 = vsel %vm177, %v269, %v333
      %v380 = vsel %vm178, %v268, %v332
      %v381 = vsel %vm177, %v267, %v331
      %v382 = vsel %vm178, %v266, %v330
      %v383 = vsel %vm177, %v265, %v329
      %v384 = vsel %vm178, %v264, %v328
      %v385 = vsel %vm177, %v263, %v327
      %v386 = vsel %vm178, %v262, %v326
      %v387 = vsel %vm177, %v261, %v325
      %v388 = vsel %vm178, %v260, %v324
      %v389 = vsel %vm177, %v259, %v323
      %v390 = vsel %vm178, %v258, %v322
      %v391 = vsel %vm177, %v257, %v321
      %v392 = vsel %vm178, %v256, %v320
      %v393 = vsel %vm177, %v255, %v319
      %v394 = vsel %vm178, %v254, %v318
      %v395 = vsel %vm177, %v253, %v317
      %v396 = vsel %vm178, %v252, %v316
      %v397 = vsel %vm177, %v251, %v315
      %v398 = vsel %vm178, %v250, %v314
      %v399 = vsel %vm177, %v249, %v313
      %v400 = vsel %vm178, %v248, %v312
      %v401 = vsel %vm177, %v247, %v311
      %v402 = vsel %vm178, %v246, %v310
      %v403 = vsel %vm177, %v245, %v309
      %v404 = vsel %vm178, %v244, %v340
      %v405 = vpack.c.bf16 %v342, %v341
      %v406 = vpack.c.bf16 %v344, %v343
      %v407 = vpack.c.bf16 %v346, %v345
      %v408 = vpack.c.bf16 %v348, %v347
      %v409 = vpack.c.bf16 %v350, %v349
      %v410 = vpack.c.bf16 %v352, %v351
      %v411 = vpack.c.bf16 %v354, %v353
      %v412 = vpack.c.bf16 %v356, %v355
      %v413 = vpack.c.bf16 %v358, %v357
      %v414 = vpack.c.bf16 %v360, %v359
      %v415 = vpack.c.bf16 %v362, %v361
      %v416 = vpack.c.bf16 %v364, %v363
      %v417 = vpack.c.bf16 %v366, %v365
      %v418 = vpack.c.bf16 %v368, %v367
      %v419 = vpack.c.bf16 %v370, %v369
      %v420 = vpack.c.bf16 %v372, %v371
      %v421 = vpack.c.bf16 %v180, %v179
      %v422 = vpack.c.bf16 %v182, %v181
      %v423 = vpack.c.bf16 %v184, %v183
      %v424 = vpack.c.bf16 %v186, %v185
      %v425 = vpack.c.bf16 %v188, %v187
      %v426 = vpack.c.bf16 %v190, %v189
      %v427 = vpack.c.bf16 %v192, %v191
      %v428 = vpack.c.bf16 %v194, %v193
      %v429 = vpack.c.bf16 %v196, %v195
      %v430 = vpack.c.bf16 %v198, %v197
      %v431 = vpack.c.bf16 %v200, %v199
      %v432 = vpack.c.bf16 %v202, %v201
      %v433 = vpack.c.bf16 %v204, %v203
      %v434 = vpack.c.bf16 %v206, %v205
      %v435 = vpack.c.bf16 %v208, %v207
      %v436 = vpack.c.bf16 %v210, %v209
      %v437 = vpack.c.bf16 %v374, %v373
      %v438 = vpack.c.bf16 %v376, %v375
      %v439 = vpack.c.bf16 %v378, %v377
      %v440 = vpack.c.bf16 %v380, %v379
      %v441 = vpack.c.bf16 %v382, %v381
      %v442 = vpack.c.bf16 %v384, %v383
      %v443 = vpack.c.bf16 %v386, %v385
      %v444 = vpack.c.bf16 %v388, %v387
      %v445 = vpack.c.bf16 %v390, %v389
      %v446 = vpack.c.bf16 %v392, %v391
      %v447 = vpack.c.bf16 %v394, %v393
      %v448 = vpack.c.bf16 %v396, %v395
      %v449 = vpack.c.bf16 %v398, %v397
      %v450 = vpack.c.bf16 %v400, %v399
      %v451 = vpack.c.bf16 %v402, %v401
      %v452 = vpack.c.bf16 %v404, %v403
      %469 = vrot.lane.b32.xlu0 %v421, 4
      %v470 = vpop.permute.xlu0 %469
      %471 = vrot.lane.b32.xlu0 %v422, 4
      %v472 = vpop.permute.xlu0 %471
      %473 = vrot.lane.b32.xlu0 %v423, 4
      %v474 = vpop.permute.xlu0 %473
      %475 = vrot.lane.b32.xlu0 %v424, 4
      %v476 = vpop.permute.xlu0 %475
      %477 = vrot.lane.b32.xlu0 %v425, 4
      %v478 = vpop.permute.xlu0 %477
      %479 = vrot.lane.b32.xlu0 %v426, 4
      %v480 = vpop.permute.xlu0 %479
      %481 = vrot.lane.b32.xlu0 %v427, 4
      %v482 = vpop.permute.xlu0 %481
      %483 = vrot.lane.b32.xlu0 %v428, 4
      %v484 = vpop.permute.xlu0 %483
      %485 = vrot.lane.b32.xlu0 %v429, 4
      %v486 = vpop.permute.xlu0 %485
      %487 = vrot.lane.b32.xlu0 %v430, 4
      %v488 = vpop.permute.xlu0 %487
      %489 = vrot.lane.b32.xlu0 %v431, 4
      %v490 = vpop.permute.xlu0 %489
      %491 = vrot.lane.b32.xlu0 %v432, 4
      %v492 = vpop.permute.xlu0 %491
      %493 = vrot.lane.b32.xlu0 %v433, 4
      %v494 = vpop.permute.xlu0 %493
      %495 = vrot.lane.b32.xlu0 %v434, 4
      %v496 = vpop.permute.xlu0 %495
      %497 = vrot.lane.b32.xlu0 %v435, 4
      %v498 = vpop.permute.xlu0 %497
      %499 = vrot.lane.b32.xlu0 %v436, 4
      %v500 = vpop.permute.xlu0 %499
      %517 = vrot.lane.b32.xlu0 %v437, 8
      %v518 = vpop.permute.xlu0 %517
      %519 = vrot.lane.b32.xlu0 %v438, 8
      %v520 = vpop.permute.xlu0 %519
      %521 = vrot.lane.b32.xlu0 %v439, 8
      %v522 = vpop.permute.xlu0 %521
      %523 = vrot.lane.b32.xlu0 %v440, 8
      %v524 = vpop.permute.xlu0 %523
      %525 = vrot.lane.b32.xlu0 %v441, 8
      %v526 = vpop.permute.xlu0 %525
      %527 = vrot.lane.b32.xlu0 %v442, 8
      %v528 = vpop.permute.xlu0 %527
      %529 = vrot.lane.b32.xlu0 %v443, 8
      %v530 = vpop.permute.xlu0 %529
      %531 = vrot.lane.b32.xlu0 %v444, 8
      %v532 = vpop.permute.xlu0 %531
      %533 = vrot.lane.b32.xlu0 %v445, 8
      %v534 = vpop.permute.xlu0 %533
      %535 = vrot.lane.b32.xlu0 %v446, 8
      %v536 = vpop.permute.xlu0 %535
      %537 = vrot.lane.b32.xlu0 %v447, 8
      %v538 = vpop.permute.xlu0 %537
      %539 = vrot.lane.b32.xlu0 %v448, 8
      %v540 = vpop.permute.xlu0 %539
      %541 = vrot.lane.b32.xlu0 %v449, 8
      %v542 = vpop.permute.xlu0 %541
      %543 = vrot.lane.b32.xlu0 %v450, 8
      %v544 = vpop.permute.xlu0 %543
      %545 = vrot.lane.b32.xlu0 %v451, 8
      %v546 = vpop.permute.xlu0 %545
      %547 = vrot.lane.b32.xlu0 %v452, 8
      %v548 = vpop.permute.xlu0 %547
      %vm549 = vcmask 31744
      %v552 = vsel %vm549, %v405, %v470
      %v555 = vsel %vm549, %v406, %v472
      %v558 = vsel %vm549, %v407, %v474
      %v561 = vsel %vm549, %v408, %v476
      %v564 = vsel %vm549, %v409, %v478
      %v567 = vsel %vm549, %v410, %v480
      %v570 = vsel %vm549, %v411, %v482
      %v573 = vsel %vm549, %v412, %v484
      %v576 = vsel %vm549, %v413, %v486
      %v579 = vsel %vm549, %v414, %v488
      %v582 = vsel %vm549, %v415, %v490
      %v585 = vsel %vm549, %v416, %v492
      %v588 = vsel %vm549, %v417, %v494
      %v591 = vsel %vm549, %v418, %v496
      %v594 = vsel %vm549, %v419, %v498
      %v597 = vsel %vm549, %v420, %v500
      %vm598 = vcmask 64512
      %v600 = vsel %vm598, %v552, %v518
      %v602 = vsel %vm598, %v555, %v520
      %v604 = vsel %vm598, %v558, %v522
      %v606 = vsel %vm598, %v561, %v524
      %v608 = vsel %vm598, %v564, %v526
      %v610 = vsel %vm598, %v567, %v528
      %v612 = vsel %vm598, %v570, %v530
      %v614 = vsel %vm598, %v573, %v532
      %v616 = vsel %vm598, %v576, %v534
      %v618 = vsel %vm598, %v579, %v536
      %v620 = vsel %vm598, %v582, %v538
      %v622 = vsel %vm598, %v585, %v540
      %v624 = vsel %vm598, %v588, %v542
      %v626 = vsel %vm598, %v591, %v544
      %v628 = vsel %vm598, %v594, %v546
      %v630 = vsel %vm598, %v597, %v548
      %s631 = scalar_lea.vmem %s1, 8
      %v632 = vld [vmem:[%s631] sm:$0xf]
      %v633 = vld [vmem:[%s631 + $0x4] sm:$0x3]
      %v634 = vld [vmem:[%s1] sm:$0xf]
      %v635 = vld [vmem:[%s1 + $0x4] sm:$0x3]
      %v638 = vunpack.c.l.b16 %v634
      %v639 = vunpack.c.l.b16 %v635
      %v640 = vpack.c.b16 %v639, %v638
      %vm641 = vcmask 97280
      %v642 = vsel %vm641, %v600, 0
      %v644 = vsel %vm641, %v602, 0
      %v646 = vsel %vm641, %v604, 0
      %v648 = vsel %vm641, %v606, 0
      %v650 = vsel %vm641, %v608, 0
      %v652 = vsel %vm641, %v610, 0
      %v654 = vsel %vm641, %v612, 0
      %v656 = vsel %vm641, %v614, 0
      %v658 = vsel %vm641, %v616, 0
      %v660 = vsel %vm641, %v618, 0
      %v662 = vsel %vm641, %v620, 0
      %v664 = vsel %vm641, %v622, 0
      %v666 = vsel %vm641, %v624, 0
      %v668 = vsel %vm641, %v626, 0
      %v670 = vsel %vm641, %v628, 0
      %v672 = vsel %vm641, %v630, 0
      %vm674 = vcmask 1045504
      %v676 = vsel %vm674, %v640, 0
      %678 = vmatprep.subr.bf16.mxu0 0
      %679 = vmatpush1.bf16.msra.mxu0 0
      %680 = vmatprep.subr.bf16.mxu0 0
      %681 = vmatpush1.bf16.msra.mxu0 0
      %682 = vmatprep.subr.bf16.mxu0 0
      %683 = vmatpush1.bf16.msra.mxu0 0
      %684 = vmatprep.subr.bf16.mxu0 0
      %685 = vmatpush1.bf16.msra.mxu0 0
      %686 = vmatprep.subr.bf16.mxu0 0
      %687 = vmatpush1.bf16.msra.mxu0 0
      %688 = vmatprep.subr.bf16.mxu0 0
      %689 = vmatpush1.bf16.msra.mxu0 0
      %690 = vmatprep.subr.bf16.mxu0 0
      %691 = vmatpush1.bf16.msra.mxu0 0
      %692 = vmatprep.subr.bf16.mxu0 0
      %693 = vmatpush1.bf16.msra.mxu0 %v676
      %694 = vmatprep.subr.bf16.mxu0 0
      %695 = vmatpush2.bf16.msra.mxu0 0
      %696 = vmatprep.subr.bf16.mxu0 0
      %697 = vmatpush2.bf16.msra.mxu0 0
      %698 = vmatprep.subr.bf16.mxu0 0
      %699 = vmatpush2.bf16.msra.mxu0 0
      %700 = vmatprep.subr.bf16.mxu0 0
      %701 = vmatpush2.bf16.msra.mxu0 0
      %702 = vmatprep.subr.bf16.mxu0 0
      %703 = vmatpush2.bf16.msra.mxu0 0
      %704 = vmatprep.subr.bf16.mxu0 0
      %705 = vmatpush2.bf16.msra.mxu0 0
      %706 = vmatprep.subr.bf16.mxu0 0
      %707 = vmatpush2.bf16.msra.mxu0 0
      %708 = vmatprep.subr.bf16.mxu0 0
      %709 = vmatpush2.bf16.msra.mxu0 0
      %710 = vmatprep.mubr.bf16.mxu0 0
      %711 = vmatmul.mubr.bf16.gmra.mxu0 %v642
      %v712 = vpop.f32.mrf.mxu0
      %v713 = vadd.f32 0.0, %v712
      %v714 = vpop.f32.mrf.mxu0
      %v715 = vpop.f32.mrf.mxu0
      %v716 = vadd.f32 0.0, %v715
      %v717 = vpop.f32.mrf.mxu0
      %718 = vmatprep.mubr.bf16.mxu0 0
      %719 = vmatmul.mubr.bf16.gmra.mxu0 %v644
      %v720 = vpop.f32.mrf.mxu0
      %v721 = vadd.f32 0.0, %v720
      %v722 = vpop.f32.mrf.mxu0
      %v723 = vpop.f32.mrf.mxu0
      %v724 = vadd.f32 0.0, %v723
      %v725 = vpop.f32.mrf.mxu0
      %726 = vmatprep.mubr.bf16.mxu0 0
      %727 = vmatmul.mubr.bf16.gmra.mxu0 %v646
      %v728 = vpop.f32.mrf.mxu0
      %v729 = vadd.f32 0.0, %v728
      %v730 = vpop.f32.mrf.mxu0
      %v731 = vpop.f32.mrf.mxu0
      %v732 = vadd.f32 0.0, %v731
      %v733 = vpop.f32.mrf.mxu0
      %734 = vmatprep.mubr.bf16.mxu0 0
      %735 = vmatmul.mubr.bf16.gmra.mxu0 %v648
      %v736 = vpop.f32.mrf.mxu0
      %v737 = vadd.f32 0.0, %v736
      %v738 = vpop.f32.mrf.mxu0
      %v739 = vpop.f32.mrf.mxu0
      %v740 = vadd.f32 0.0, %v739
      %v741 = vpop.f32.mrf.mxu0
      %742 = vmatprep.mubr.bf16.mxu0 0
      %743 = vmatmul.mubr.bf16.gmra.mxu0 %v650
      %v744 = vpop.f32.mrf.mxu0
      %v745 = vadd.f32 0.0, %v744
      %v746 = vpop.f32.mrf.mxu0
      %v747 = vpop.f32.mrf.mxu0
      %v748 = vadd.f32 0.0, %v747
      %v749 = vpop.f32.mrf.mxu0
      %750 = vmatprep.mubr.bf16.mxu0 0
      %751 = vmatmul.mubr.bf16.gmra.mxu0 %v652
      %v752 = vpop.f32.mrf.mxu0
      %v753 = vadd.f32 0.0, %v752
      %v754 = vpop.f32.mrf.mxu0
      %v755 = vpop.f32.mrf.mxu0
      %v756 = vadd.f32 0.0, %v755
      %v757 = vpop.f32.mrf.mxu0
      %758 = vmatprep.mubr.bf16.mxu0 0
      %759 = vmatmul.mubr.bf16.gmra.mxu0 %v654
      %v760 = vpop.f32.mrf.mxu0
      %v761 = vadd.f32 0.0, %v760
      %v762 = vpop.f32.mrf.mxu0
      %v763 = vpop.f32.mrf.mxu0
      %v764 = vadd.f32 0.0, %v763
      %v765 = vpop.f32.mrf.mxu0
      %766 = vmatprep.mubr.bf16.mxu0 0
      %767 = vmatmul.mubr.bf16.gmra.mxu0 %v656
      %v768 = vpop.f32.mrf.mxu0
      %v769 = vadd.f32 0.0, %v768
      %v770 = vpop.f32.mrf.mxu0
      %v771 = vpop.f32.mrf.mxu0
      %v772 = vadd.f32 0.0, %v771
      %v773 = vpop.f32.mrf.mxu0
      %774 = vmatprep.mubr.bf16.mxu0 0
      %775 = vmatmul.mubr.bf16.gmra.mxu0 %v658
      %v776 = vpop.f32.mrf.mxu0
      %v777 = vadd.f32 0.0, %v776
      %v778 = vpop.f32.mrf.mxu0
      %v779 = vpop.f32.mrf.mxu0
      %v780 = vadd.f32 0.0, %v779
      %v781 = vpop.f32.mrf.mxu0
      %782 = vmatprep.mubr.bf16.mxu0 0
      %783 = vmatmul.mubr.bf16.gmra.mxu0 %v660
      %v784 = vpop.f32.mrf.mxu0
      %v785 = vadd.f32 0.0, %v784
      %v786 = vpop.f32.mrf.mxu0
      %v787 = vpop.f32.mrf.mxu0
      %v788 = vadd.f32 0.0, %v787
      %v789 = vpop.f32.mrf.mxu0
      %790 = vmatprep.mubr.bf16.mxu0 0
      %791 = vmatmul.mubr.bf16.gmra.mxu0 %v662
      %v792 = vpop.f32.mrf.mxu0
      %v793 = vadd.f32 0.0, %v792
      %v794 = vpop.f32.mrf.mxu0
      %v795 = vpop.f32.mrf.mxu0
      %v796 = vadd.f32 0.0, %v795
      %v797 = vpop.f32.mrf.mxu0
      %798 = vmatprep.mubr.bf16.mxu0 0
      %799 = vmatmul.mubr.bf16.gmra.mxu0 %v664
      %v800 = vpop.f32.mrf.mxu0
      %v801 = vadd.f32 0.0, %v800
      %v802 = vpop.f32.mrf.mxu0
      %v803 = vpop.f32.mrf.mxu0
      %v804 = vadd.f32 0.0, %v803
      %v805 = vpop.f32.mrf.mxu0
      %806 = vmatprep.mubr.bf16.mxu0 0
      %807 = vmatmul.mubr.bf16.gmra.mxu0 %v666
      %v808 = vpop.f32.mrf.mxu0
      %v809 = vadd.f32 0.0, %v808
      %v810 = vpop.f32.mrf.mxu0
      %v811 = vpop.f32.mrf.mxu0
      %v812 = vadd.f32 0.0, %v811
      %v813 = vpop.f32.mrf.mxu0
      %814 = vmatprep.mubr.bf16.mxu0 0
      %815 = vmatmul.mubr.bf16.gmra.mxu0 %v668
      %v816 = vpop.f32.mrf.mxu0
      %v817 = vadd.f32 0.0, %v816
      %v818 = vpop.f32.mrf.mxu0
      %v819 = vpop.f32.mrf.mxu0
      %v820 = vadd.f32 0.0, %v819
      %v821 = vpop.f32.mrf.mxu0
      %822 = vmatprep.mubr.bf16.mxu0 0
      %823 = vmatmul.mubr.bf16.gmra.mxu0 %v670
      %v824 = vpop.f32.mrf.mxu0
      %v825 = vadd.f32 0.0, %v824
      %v826 = vpop.f32.mrf.mxu0
      %v827 = vpop.f32.mrf.mxu0
      %v828 = vadd.f32 0.0, %v827
      %v829 = vpop.f32.mrf.mxu0
      %830 = vmatprep.mubr.bf16.mxu0 0
      %831 = vmatmul.mubr.bf16.gmra.mxu0 %v672
      %v832 = vpop.f32.mrf.mxu0
      %v833 = vpop.f32.mrf.mxu0
      %v834 = vpop.f32.mrf.mxu0
      %v835 = vpop.f32.mrf.mxu0
      %836 = vdwg.mxu0
      %s837 = scalar_lea.vmem %s1, 16
      %v838 = vld [vmem:[%s837] sm:$0xf]
      %v839 = vld [vmem:[%s837 + $0x4] sm:$0x3]
      %v842 = vunpack.c.l.b16 %v838
      %v843 = vunpack.c.l.b16 %v839
      %v844 = vpack.c.b16 %v843, %v842
      %v846 = vsel %vm674, %v844, 0
      %848 = vmatprep.subr.bf16.mxu0 0
      %849 = vmatpush1.bf16.msra.mxu0 0
      %850 = vmatprep.subr.bf16.mxu0 0
      %851 = vmatpush1.bf16.msra.mxu0 0
      %852 = vmatprep.subr.bf16.mxu0 0
      %853 = vmatpush1.bf16.msra.mxu0 0
      %854 = vmatprep.subr.bf16.mxu0 0
      %855 = vmatpush1.bf16.msra.mxu0 0
      %856 = vmatprep.subr.bf16.mxu0 0
      %857 = vmatpush1.bf16.msra.mxu0 0
      %858 = vmatprep.subr.bf16.mxu0 0
      %859 = vmatpush1.bf16.msra.mxu0 0
      %860 = vmatprep.subr.bf16.mxu0 0
      %861 = vmatpush1.bf16.msra.mxu0 0
      %862 = vmatprep.subr.bf16.mxu0 0
      %863 = vmatpush1.bf16.msra.mxu0 %v846
      %864 = vmatprep.subr.bf16.mxu0 0
      %865 = vmatpush2.bf16.msra.mxu0 0
      %866 = vmatprep.subr.bf16.mxu0 0
      %867 = vmatpush2.bf16.msra.mxu0 0
      %868 = vmatprep.subr.bf16.mxu0 0
      %869 = vmatpush2.bf16.msra.mxu0 0
      %870 = vmatprep.subr.bf16.mxu0 0
      %871 = vmatpush2.bf16.msra.mxu0 0
      %872 = vmatprep.subr.bf16.mxu0 0
      %873 = vmatpush2.bf16.msra.mxu0 0
      %874 = vmatprep.subr.bf16.mxu0 0
      %875 = vmatpush2.bf16.msra.mxu0 0
      %876 = vmatprep.subr.bf16.mxu0 0
      %877 = vmatpush2.bf16.msra.mxu0 0
      %878 = vmatprep.subr.bf16.mxu0 0
      %879 = vmatpush2.bf16.msra.mxu0 0
      %880 = vmatprep.mubr.bf16.mxu0 0
      %881 = vmatmul.mubr.bf16.gmra.mxu0 %v642
      %v882 = vpop.f32.mrf.mxu0
      %v883 = vpop.f32.mrf.mxu0
      %v884 = vpop.f32.mrf.mxu0
      %v885 = vpop.f32.mrf.mxu0
      %886 = vmatprep.mubr.bf16.mxu0 0
      %887 = vmatmul.mubr.bf16.gmra.mxu0 %v644
      %v888 = vpop.f32.mrf.mxu0
      %v889 = vadd.f32 0.0, %v888
      %v890 = vpop.f32.mrf.mxu0
      %v891 = vpop.f32.mrf.mxu0
      %v892 = vadd.f32 0.0, %v891
      %v893 = vpop.f32.mrf.mxu0
      %894 = vmatprep.mubr.bf16.mxu0 0
      %895 = vmatmul.mubr.bf16.gmra.mxu0 %v646
      %v896 = vpop.f32.mrf.mxu0
      %v897 = vadd.f32 0.0, %v896
      %v898 = vpop.f32.mrf.mxu0
      %v899 = vpop.f32.mrf.mxu0
      %v900 = vadd.f32 0.0, %v899
      %v901 = vpop.f32.mrf.mxu0
      %902 = vmatprep.mubr.bf16.mxu0 0
      %903 = vmatmul.mubr.bf16.gmra.mxu0 %v648
      %v904 = vpop.f32.mrf.mxu0
      %v905 = vadd.f32 0.0, %v904
      %v906 = vpop.f32.mrf.mxu0
      %v907 = vpop.f32.mrf.mxu0
      %v908 = vadd.f32 0.0, %v907
      %v909 = vpop.f32.mrf.mxu0
      %910 = vmatprep.mubr.bf16.mxu0 0
      %911 = vmatmul.mubr.bf16.gmra.mxu0 %v650
      %v912 = vpop.f32.mrf.mxu0
      %v913 = vadd.f32 0.0, %v912
      %v914 = vpop.f32.mrf.mxu0
      %v915 = vpop.f32.mrf.mxu0
      %v916 = vadd.f32 0.0, %v915
      %v917 = vpop.f32.mrf.mxu0
      %918 = vmatprep.mubr.bf16.mxu0 0
      %919 = vmatmul.mubr.bf16.gmra.mxu0 %v652
      %v920 = vpop.f32.mrf.mxu0
      %v921 = vadd.f32 0.0, %v920
      %v922 = vpop.f32.mrf.mxu0
      %v923 = vpop.f32.mrf.mxu0
      %v924 = vadd.f32 0.0, %v923
      %v925 = vpop.f32.mrf.mxu0
      %926 = vmatprep.mubr.bf16.mxu0 0
      %927 = vmatmul.mubr.bf16.gmra.mxu0 %v654
      %v928 = vpop.f32.mrf.mxu0
      %v929 = vadd.f32 0.0, %v928
      %v930 = vpop.f32.mrf.mxu0
      %v931 = vpop.f32.mrf.mxu0
      %v932 = vadd.f32 0.0, %v931
      %v933 = vpop.f32.mrf.mxu0
      %934 = vmatprep.mubr.bf16.mxu0 0
      %935 = vmatmul.mubr.bf16.gmra.mxu0 %v656
      %v936 = vpop.f32.mrf.mxu0
      %v937 = vadd.f32 0.0, %v936
      %v938 = vpop.f32.mrf.mxu0
      %v939 = vpop.f32.mrf.mxu0
      %v940 = vadd.f32 0.0, %v939
      %v941 = vpop.f32.mrf.mxu0
      %942 = vmatprep.mubr.bf16.mxu0 0
      %943 = vmatmul.mubr.bf16.gmra.mxu0 %v658
      %v944 = vpop.f32.mrf.mxu0
      %v945 = vadd.f32 0.0, %v944
      %v946 = vpop.f32.mrf.mxu0
      %v947 = vpop.f32.mrf.mxu0
      %v948 = vadd.f32 0.0, %v947
      %v949 = vpop.f32.mrf.mxu0
      %950 = vmatprep.mubr.bf16.mxu0 0
      %951 = vmatmul.mubr.bf16.gmra.mxu0 %v660
      %v952 = vpop.f32.mrf.mxu0
      %v953 = vadd.f32 0.0, %v952
      %v954 = vpop.f32.mrf.mxu0
      %v955 = vpop.f32.mrf.mxu0
      %v956 = vadd.f32 0.0, %v955
      %v957 = vpop.f32.mrf.mxu0
      %958 = vmatprep.mubr.bf16.mxu0 0
      %959 = vmatmul.mubr.bf16.gmra.mxu0 %v662
      %v960 = vpop.f32.mrf.mxu0
      %v961 = vadd.f32 0.0, %v960
      %v962 = vpop.f32.mrf.mxu0
      %v963 = vpop.f32.mrf.mxu0
      %v964 = vadd.f32 0.0, %v963
      %v965 = vpop.f32.mrf.mxu0
      %966 = vmatprep.mubr.bf16.mxu0 0
      %967 = vmatmul.mubr.bf16.gmra.mxu0 %v664
      %v968 = vpop.f32.mrf.mxu0
      %v969 = vadd.f32 0.0, %v968
      %v970 = vpop.f32.mrf.mxu0
      %v971 = vpop.f32.mrf.mxu0
      %v972 = vadd.f32 0.0, %v971
      %v973 = vpop.f32.mrf.mxu0
      %974 = vmatprep.mubr.bf16.mxu0 0
      %975 = vmatmul.mubr.bf16.gmra.mxu0 %v666
      %v976 = vpop.f32.mrf.mxu0
      %v977 = vadd.f32 0.0, %v976
      %v978 = vpop.f32.mrf.mxu0
      %v979 = vpop.f32.mrf.mxu0
      %v980 = vadd.f32 0.0, %v979
      %v981 = vpop.f32.mrf.mxu0
      %982 = vmatprep.mubr.bf16.mxu0 0
      %983 = vmatmul.mubr.bf16.gmra.mxu0 %v668
      %v984 = vpop.f32.mrf.mxu0
      %v985 = vadd.f32 0.0, %v984
      %v986 = vpop.f32.mrf.mxu0
      %v987 = vpop.f32.mrf.mxu0
      %v988 = vadd.f32 0.0, %v987
      %v989 = vpop.f32.mrf.mxu0
      %990 = vmatprep.mubr.bf16.mxu0 0
      %991 = vmatmul.mubr.bf16.gmra.mxu0 %v670
      %v992 = vpop.f32.mrf.mxu0
      %v993 = vadd.f32 0.0, %v992
      %v994 = vpop.f32.mrf.mxu0
      %v995 = vpop.f32.mrf.mxu0
      %v996 = vadd.f32 0.0, %v995
      %v997 = vpop.f32.mrf.mxu0
      %998 = vmatprep.mubr.bf16.mxu0 0
      %999 = vmatmul.mubr.bf16.gmra.mxu0 %v672
      %v1000 = vpop.f32.mrf.mxu0
      %v1001 = vadd.f32 0.0, %v1000
      %v1002 = vpop.f32.mrf.mxu0
      %v1003 = vpop.f32.mrf.mxu0
      %v1004 = vadd.f32 0.0, %v1003
      %v1005 = vpop.f32.mrf.mxu0
      %1006 = vdwg.mxu0
      %v1009 = vunpack.c.l.b16 %v632
      %v1010 = vunpack.c.l.b16 %v633
      %v1011 = vpack.c.b16 %v1010, %v1009
      %v1013 = vsel %vm674, %v1011, 0
      %1015 = vmatprep.subr.bf16.mxu0 0
      %1016 = vmatpush1.bf16.msra.mxu0 0
      %1017 = vmatprep.subr.bf16.mxu0 0
      %1018 = vmatpush1.bf16.msra.mxu0 0
      %1019 = vmatprep.subr.bf16.mxu0 0
      %1020 = vmatpush1.bf16.msra.mxu0 0
      %1021 = vmatprep.subr.bf16.mxu0 0
      %1022 = vmatpush1.bf16.msra.mxu0 0
      %1023 = vmatprep.subr.bf16.mxu0 0
      %1024 = vmatpush1.bf16.msra.mxu0 0
      %1025 = vmatprep.subr.bf16.mxu0 0
      %1026 = vmatpush1.bf16.msra.mxu0 0
      %1027 = vmatprep.subr.bf16.mxu0 0
      %1028 = vmatpush1.bf16.msra.mxu0 0
      %1029 = vmatprep.subr.bf16.mxu0 0
      %1030 = vmatpush1.bf16.msra.mxu0 %v1013
      %1031 = vmatprep.subr.bf16.mxu0 0
      %1032 = vmatpush2.bf16.msra.mxu0 0
      %1033 = vmatprep.subr.bf16.mxu0 0
      %1034 = vmatpush2.bf16.msra.mxu0 0
      %1035 = vmatprep.subr.bf16.mxu0 0
      %1036 = vmatpush2.bf16.msra.mxu0 0
      %1037 = vmatprep.subr.bf16.mxu0 0
      %1038 = vmatpush2.bf16.msra.mxu0 0
      %1039 = vmatprep.subr.bf16.mxu0 0
      %1040 = vmatpush2.bf16.msra.mxu0 0
      %1041 = vmatprep.subr.bf16.mxu0 0
      %1042 = vmatpush2.bf16.msra.mxu0 0
      %1043 = vmatprep.subr.bf16.mxu0 0
      %1044 = vmatpush2.bf16.msra.mxu0 0
      %1045 = vmatprep.subr.bf16.mxu0 0
      %1046 = vmatpush2.bf16.msra.mxu0 0
      %1047 = vmatprep.mubr.bf16.mxu0 0
      %1048 = vmatmul.mubr.bf16.gmra.mxu0 %v642
      %v1049 = vpop.f32.mrf.mxu0
      %v1050 = vadd.f32 %v721, %v1049
      %v1051 = vpop.f32.mrf.mxu0
      %v1052 = vpop.f32.mrf.mxu0
      %v1053 = vadd.f32 %v724, %v1052
      %v1054 = vpop.f32.mrf.mxu0
      %1055 = vmatprep.mubr.bf16.mxu0 0
      %1056 = vmatmul.mubr.bf16.gmra.mxu0 %v644
      %v1057 = vpop.f32.mrf.mxu0
      %v1058 = vadd.f32 %v713, %v1057
      %v1059 = vpop.f32.mrf.mxu0
      %v1060 = vpop.f32.mrf.mxu0
      %v1061 = vadd.f32 %v716, %v1060
      %v1062 = vpop.f32.mrf.mxu0
      %1063 = vmatprep.mubr.bf16.mxu0 0
      %1064 = vmatmul.mubr.bf16.gmra.mxu0 %v646
      %v1065 = vpop.f32.mrf.mxu0
      %v1066 = vadd.f32 %v721, %v1065
      %v1067 = vpop.f32.mrf.mxu0
      %v1068 = vpop.f32.mrf.mxu0
      %v1069 = vadd.f32 %v724, %v1068
      %v1070 = vpop.f32.mrf.mxu0
      %1071 = vmatprep.mubr.bf16.mxu0 0
      %1072 = vmatmul.mubr.bf16.gmra.mxu0 %v648
      %v1073 = vpop.f32.mrf.mxu0
      %v1074 = vadd.f32 %v729, %v1073
      %v1075 = vpop.f32.mrf.mxu0
      %v1076 = vpop.f32.mrf.mxu0
      %v1077 = vadd.f32 %v732, %v1076
      %v1078 = vpop.f32.mrf.mxu0
      %1079 = vmatprep.mubr.bf16.mxu0 0
      %1080 = vmatmul.mubr.bf16.gmra.mxu0 %v650
      %v1081 = vpop.f32.mrf.mxu0
      %v1082 = vadd.f32 %v737, %v1081
      %v1083 = vpop.f32.mrf.mxu0
      %v1084 = vpop.f32.mrf.mxu0
      %v1085 = vadd.f32 %v740, %v1084
      %v1086 = vpop.f32.mrf.mxu0
      %1087 = vmatprep.mubr.bf16.mxu0 0
      %1088 = vmatmul.mubr.bf16.gmra.mxu0 %v652
      %v1089 = vpop.f32.mrf.mxu0
      %v1090 = vadd.f32 %v745, %v1089
      %v1091 = vpop.f32.mrf.mxu0
      %v1092 = vpop.f32.mrf.mxu0
      %v1093 = vadd.f32 %v748, %v1092
      %v1094 = vpop.f32.mrf.mxu0
      %1095 = vmatprep.mubr.bf16.mxu0 0
      %1096 = vmatmul.mubr.bf16.gmra.mxu0 %v654
      %v1097 = vpop.f32.mrf.mxu0
      %v1098 = vadd.f32 %v753, %v1097
      %v1099 = vpop.f32.mrf.mxu0
      %v1100 = vpop.f32.mrf.mxu0
      %v1101 = vadd.f32 %v756, %v1100
      %v1102 = vpop.f32.mrf.mxu0
      %1103 = vmatprep.mubr.bf16.mxu0 0
      %1104 = vmatmul.mubr.bf16.gmra.mxu0 %v656
      %v1105 = vpop.f32.mrf.mxu0
      %v1106 = vadd.f32 %v761, %v1105
      %v1107 = vpop.f32.mrf.mxu0
      %v1108 = vpop.f32.mrf.mxu0
      %v1109 = vadd.f32 %v764, %v1108
      %v1110 = vpop.f32.mrf.mxu0
      %1111 = vmatprep.mubr.bf16.mxu0 0
      %1112 = vmatmul.mubr.bf16.gmra.mxu0 %v658
      %v1113 = vpop.f32.mrf.mxu0
      %v1114 = vadd.f32 %v769, %v1113
      %v1115 = vpop.f32.mrf.mxu0
      %v1116 = vpop.f32.mrf.mxu0
      %v1117 = vadd.f32 %v772, %v1116
      %v1118 = vpop.f32.mrf.mxu0
      %1119 = vmatprep.mubr.bf16.mxu0 0
      %1120 = vmatmul.mubr.bf16.gmra.mxu0 %v660
      %v1121 = vpop.f32.mrf.mxu0
      %v1122 = vadd.f32 %v777, %v1121
      %v1123 = vpop.f32.mrf.mxu0
      %v1124 = vpop.f32.mrf.mxu0
      %v1125 = vadd.f32 %v780, %v1124
      %v1126 = vpop.f32.mrf.mxu0
      %1127 = vmatprep.mubr.bf16.mxu0 0
      %1128 = vmatmul.mubr.bf16.gmra.mxu0 %v662
      %v1129 = vpop.f32.mrf.mxu0
      %v1130 = vadd.f32 %v785, %v1129
      %v1131 = vpop.f32.mrf.mxu0
      %v1132 = vpop.f32.mrf.mxu0
      %v1133 = vadd.f32 %v788, %v1132
      %v1134 = vpop.f32.mrf.mxu0
      %1135 = vmatprep.mubr.bf16.mxu0 0
      %1136 = vmatmul.mubr.bf16.gmra.mxu0 %v664
      %v1137 = vpop.f32.mrf.mxu0
      %v1138 = vadd.f32 %v793, %v1137
      %v1139 = vpop.f32.mrf.mxu0
      %v1140 = vpop.f32.mrf.mxu0
      %v1141 = vadd.f32 %v796, %v1140
      %v1142 = vpop.f32.mrf.mxu0
      %1143 = vmatprep.mubr.bf16.mxu0 0
      %1144 = vmatmul.mubr.bf16.gmra.mxu0 %v666
      %v1145 = vpop.f32.mrf.mxu0
      %v1146 = vadd.f32 %v801, %v1145
      %v1147 = vpop.f32.mrf.mxu0
      %v1148 = vpop.f32.mrf.mxu0
      %v1149 = vadd.f32 %v804, %v1148
      %v1150 = vpop.f32.mrf.mxu0
      %1151 = vmatprep.mubr.bf16.mxu0 0
      %1152 = vmatmul.mubr.bf16.gmra.mxu0 %v668
      %v1153 = vpop.f32.mrf.mxu0
      %v1154 = vadd.f32 %v809, %v1153
      %v1155 = vpop.f32.mrf.mxu0
      %v1156 = vpop.f32.mrf.mxu0
      %v1157 = vadd.f32 %v812, %v1156
      %v1158 = vpop.f32.mrf.mxu0
      %1159 = vmatprep.mubr.bf16.mxu0 0
      %1160 = vmatmul.mubr.bf16.gmra.mxu0 %v670
      %v1161 = vpop.f32.mrf.mxu0
      %v1162 = vadd.f32 %v817, %v1161
      %v1163 = vpop.f32.mrf.mxu0
      %v1164 = vpop.f32.mrf.mxu0
      %v1165 = vadd.f32 %v820, %v1164
      %v1166 = vpop.f32.mrf.mxu0
      %1167 = vmatprep.mubr.bf16.mxu0 0
      %1168 = vmatmul.mubr.bf16.gmra.mxu0 %v672
      %v1169 = vpop.f32.mrf.mxu0
      %v1170 = vadd.f32 %v825, %v1169
      %v1171 = vpop.f32.mrf.mxu0
      %v1172 = vpop.f32.mrf.mxu0
      %v1173 = vadd.f32 %v828, %v1172
      %v1174 = vpop.f32.mrf.mxu0
      %1175 = vdwg.mxu0
      %v1176 = vadd.f32 %v1050, %v889
      %v1177 = vadd.f32 %v1053, %v892
      %v1178 = vadd.f32 %v1058, %v897
      %v1179 = vadd.f32 %v1061, %v900
      %v1180 = vadd.f32 %v1066, %v905
      %v1181 = vadd.f32 %v1069, %v908
      %v1182 = vadd.f32 %v1074, %v913
      %v1183 = vadd.f32 %v1077, %v916
      %v1184 = vadd.f32 %v1082, %v921
      %v1185 = vadd.f32 %v1085, %v924
      %v1186 = vadd.f32 %v1090, %v929
      %v1187 = vadd.f32 %v1093, %v932
      %v1188 = vadd.f32 %v1098, %v937
      %v1189 = vadd.f32 %v1101, %v940
      %v1190 = vadd.f32 %v1106, %v945
      %v1191 = vadd.f32 %v1109, %v948
      %v1192 = vadd.f32 %v1114, %v953
      %v1193 = vadd.f32 %v1117, %v956
      %v1194 = vadd.f32 %v1122, %v961
      %v1195 = vadd.f32 %v1125, %v964
      %v1196 = vadd.f32 %v1130, %v969
      %v1197 = vadd.f32 %v1133, %v972
      %v1198 = vadd.f32 %v1138, %v977
      %v1199 = vadd.f32 %v1141, %v980
      %v1200 = vadd.f32 %v1146, %v985
      %v1201 = vadd.f32 %v1149, %v988
      %v1202 = vadd.f32 %v1154, %v993
      %v1203 = vadd.f32 %v1157, %v996
      %v1204 = vadd.f32 %v1162, %v1001
      %v1205 = vadd.f32 %v1165, %v1004
      %v1206 = vadd.f32 %v1170, %v993
      %v1207 = vadd.f32 %v1173, %v996
      %v1208 = vsel %vm549, %v1176, 0.0
      %v1209 = vsel %vm549, %v1177, 0.0
      %v1210 = vadd.f32 %v1208, %v1209
      %v1211 = vsel %vm549, %v1178, 0.0
      %v1212 = vadd.f32 %v1210, %v1211
      %v1213 = vsel %vm549, %v1179, 0.0
      %v1214 = vadd.f32 %v1212, %v1213
      %v1215 = vsel %vm549, %v1180, 0.0
      %v1216 = vadd.f32 %v1214, %v1215
      %v1217 = vsel %vm549, %v1181, 0.0
      %v1218 = vadd.f32 %v1216, %v1217
      %v1219 = vsel %vm549, %v1182, 0.0
      %v1220 = vadd.f32 %v1218, %v1219
      %v1221 = vsel %vm549, %v1183, 0.0
      %v1222 = vadd.f32 %v1220, %v1221
      %v1223 = vsel %vm549, %v1184, 0.0
      %v1224 = vadd.f32 %v1222, %v1223
      %v1225 = vsel %vm549, %v1185, 0.0
      %v1226 = vadd.f32 %v1224, %v1225
      %v1227 = vsel %vm549, %v1186, 0.0
      %v1228 = vadd.f32 %v1226, %v1227
      %v1229 = vsel %vm549, %v1187, 0.0
      %v1230 = vadd.f32 %v1228, %v1229
      %v1231 = vsel %vm549, %v1188, 0.0
      %v1232 = vadd.f32 %v1230, %v1231
      %v1233 = vsel %vm549, %v1189, 0.0
      %v1234 = vadd.f32 %v1232, %v1233
      %v1235 = vsel %vm549, %v1190, 0.0
      %v1236 = vadd.f32 %v1234, %v1235
      %v1237 = vsel %vm549, %v1191, 0.0
      %v1238 = vadd.f32 %v1236, %v1237
      %v1239 = vsel %vm549, %v1192, 0.0
      %v1240 = vadd.f32 %v1238, %v1239
      %v1241 = vsel %vm549, %v1193, 0.0
      %v1242 = vadd.f32 %v1240, %v1241
      %v1243 = vsel %vm549, %v1194, 0.0
      %v1244 = vadd.f32 %v1242, %v1243
      %v1245 = vsel %vm549, %v1195, 0.0
      %v1246 = vadd.f32 %v1244, %v1245
      %v1247 = vsel %vm549, %v1196, 0.0
      %v1248 = vadd.f32 %v1246, %v1247
      %v1249 = vsel %vm549, %v1197, 0.0
      %v1250 = vadd.f32 %v1248, %v1249
      %v1251 = vsel %vm549, %v1198, 0.0
      %v1252 = vadd.f32 %v1250, %v1251
      %v1253 = vsel %vm549, %v1199, 0.0
      %v1254 = vadd.f32 %v1252, %v1253
      %v1255 = vsel %vm549, %v1200, 0.0
      %v1256 = vadd.f32 %v1254, %v1255
      %v1257 = vsel %vm549, %v1201, 0.0
      %v1258 = vadd.f32 %v1256, %v1257
      %v1259 = vsel %vm549, %v1202, 0.0
      %v1260 = vadd.f32 %v1258, %v1259
      %v1261 = vsel %vm549, %v1203, 0.0
      %v1262 = vadd.f32 %v1260, %v1261
      %v1263 = vsel %vm549, %v1204, 0.0
      %v1264 = vadd.f32 %v1262, %v1263
      %v1265 = vsel %vm549, %v1205, 0.0
      %v1266 = vadd.f32 %v1264, %v1265
      %v1267 = vsel %vm549, %v1206, 0.0
      %v1268 = vadd.f32 %v1266, %v1267
      %v1269 = vsel %vm549, %v1207, 0.0
      %v1270 = vadd.f32 %v1268, %v1269
      %v1271 = vrot.slane %v1270, 4
      %v1272 = vadd.f32 %v1270, %v1271
      %v1273 = vrot.slane %v1272, 2
      %v1274 = vadd.f32 %v1272, %v1273
      %v1275 = vrot.slane %v1274, 1
      %v1276 = vadd.f32 %v1274, %v1275
      %v1277 = vmul.f32 %v1276, 0.00390625
      %v1278 = vmul.f32 %v1176, %v1176
      %v1279 = vmul.f32 %v1177, %v1177
      %v1280 = vmul.f32 %v1178, %v1178
      %v1281 = vmul.f32 %v1179, %v1179
      %v1282 = vmul.f32 %v1180, %v1180
      %v1283 = vmul.f32 %v1181, %v1181
      %v1284 = vmul.f32 %v1182, %v1182
      %v1285 = vmul.f32 %v1183, %v1183
      %v1286 = vmul.f32 %v1184, %v1184
      %v1287 = vmul.f32 %v1185, %v1185
      %v1288 = vmul.f32 %v1186, %v1186
      %v1289 = vmul.f32 %v1187, %v1187
      %v1290 = vmul.f32 %v1188, %v1188
      %v1291 = vmul.f32 %v1189, %v1189
      %v1292 = vmul.f32 %v1190, %v1190
      %v1293 = vmul.f32 %v1191, %v1191
      %v1294 = vmul.f32 %v1192, %v1192
      %v1295 = vmul.f32 %v1193, %v1193
      %v1296 = vmul.f32 %v1194, %v1194
      %v1297 = vmul.f32 %v1195, %v1195
      %v1298 = vmul.f32 %v1196, %v1196
      %v1299 = vmul.f32 %v1197, %v1197
      %v1300 = vmul.f32 %v1198, %v1198
      %v1301 = vmul.f32 %v1199, %v1199
      %v1302 = vmul.f32 %v1200, %v1200
      %v1303 = vmul.f32 %v1201, %v1201
      %v1304 = vmul.f32 %v1202, %v1202
      %v1305 = vmul.f32 %v1203, %v1203
      %v1306 = vmul.f32 %v1204, %v1204
      %v1307 = vmul.f32 %v1205, %v1205
      %v1308 = vmul.f32 %v1206, %v1206
      %v1309 = vmul.f32 %v1207, %v1207
      %v1310 = vsel %vm549, %v1278, 0.0
      %v1311 = vsel %vm549, %v1279, 0.0
      %v1312 = vadd.f32 %v1310, %v1311
      %v1313 = vsel %vm549, %v1280, 0.0
      %v1314 = vadd.f32 %v1312, %v1313
      %v1315 = vsel %vm549, %v1281, 0.0
      %v1316 = vadd.f32 %v1314, %v1315
      %v1317 = vsel %vm549, %v1282, 0.0
      %v1318 = vadd.f32 %v1316, %v1317
      %v1319 = vsel %vm549, %v1283, 0.0
      %v1320 = vadd.f32 %v1318, %v1319
      %v1321 = vsel %vm549, %v1284, 0.0
      %v1322 = vadd.f32 %v1320, %v1321
      %v1323 = vsel %vm549, %v1285, 0.0
      %v1324 = vadd.f32 %v1322, %v1323
      %v1325 = vsel %vm549, %v1286, 0.0
      %v1326 = vadd.f32 %v1324, %v1325
      %v1327 = vsel %vm549, %v1287, 0.0
      %v1328 = vadd.f32 %v1326, %v1327
      %v1329 = vsel %vm549, %v1288, 0.0
      %v1330 = vadd.f32 %v1328, %v1329
      %v1331 = vsel %vm549, %v1289, 0.0
      %v1332 = vadd.f32 %v1330, %v1331
      %v1333 = vsel %vm549, %v1290, 0.0
      %v1334 = vadd.f32 %v1332, %v1333
      %v1335 = vsel %vm549, %v1291, 0.0
      %v1336 = vadd.f32 %v1334, %v1335
      %v1337 = vsel %vm549, %v1292, 0.0
      %v1338 = vadd.f32 %v1336, %v1337
      %v1339 = vsel %vm549, %v1293, 0.0
      %v1340 = vadd.f32 %v1338, %v1339
      %v1341 = vsel %vm549, %v1294, 0.0
      %v1342 = vadd.f32 %v1340, %v1341
      %v1343 = vsel %vm549, %v1295, 0.0
      %v1344 = vadd.f32 %v1342, %v1343
      %v1345 = vsel %vm549, %v1296, 0.0
      %v1346 = vadd.f32 %v1344, %v1345
      %v1347 = vsel %vm549, %v1297, 0.0
      %v1348 = vadd.f32 %v1346, %v1347
      %v1349 = vsel %vm549, %v1298, 0.0
      %v1350 = vadd.f32 %v1348, %v1349
      %v1351 = vsel %vm549, %v1299, 0.0
      %v1352 = vadd.f32 %v1350, %v1351
      %v1353 = vsel %vm549, %v1300, 0.0
      %v1354 = vadd.f32 %v1352, %v1353
      %v1355 = vsel %vm549, %v1301, 0.0
      %v1356 = vadd.f32 %v1354, %v1355
      %v1357 = vsel %vm549, %v1302, 0.0
      %v1358 = vadd.f32 %v1356, %v1357
      %v1359 = vsel %vm549, %v1303, 0.0
      %v1360 = vadd.f32 %v1358, %v1359
      %v1361 = vsel %vm549, %v1304, 0.0
      %v1362 = vadd.f32 %v1360, %v1361
      %v1363 = vsel %vm549, %v1305, 0.0
      %v1364 = vadd.f32 %v1362, %v1363
      %v1365 = vsel %vm549, %v1306, 0.0
      %v1366 = vadd.f32 %v1364, %v1365
      %v1367 = vsel %vm549, %v1307, 0.0
      %v1368 = vadd.f32 %v1366, %v1367
      %v1369 = vsel %vm549, %v1308, 0.0
      %v1370 = vadd.f32 %v1368, %v1369
      %v1371 = vsel %vm549, %v1309, 0.0
      %v1372 = vadd.f32 %v1370, %v1371
      %v1373 = vrot.slane %v1372, 4
      %v1374 = vadd.f32 %v1372, %v1373
      %v1375 = vrot.slane %v1374, 2
      %v1376 = vadd.f32 %v1374, %v1375
      %v1377 = vrot.slane %v1376, 1
      %v1378 = vadd.f32 %v1376, %v1377
      %v1379 = vmul.f32 %v1378, 0.00390625
      %v1380 = vmul.f32 %v1277, %v1277
      %v1381 = vsub.f32 %v1379, %v1380
      %v1382 = vsub.f32 %v1176, %v1277
      %v1383 = vsub.f32 %v1177, %v1277
      %v1384 = vsub.f32 %v1178, %v1277
      %v1385 = vsub.f32 %v1179, %v1277
      %v1386 = vsub.f32 %v1180, %v1277
      %v1387 = vsub.f32 %v1181, %v1277
      %v1388 = vsub.f32 %v1182, %v1277
      %v1389 = vsub.f32 %v1183, %v1277
      %v1390 = vsub.f32 %v1184, %v1277
      %v1391 = vsub.f32 %v1185, %v1277
      %v1392 = vsub.f32 %v1186, %v1277
      %v1393 = vsub.f32 %v1187, %v1277
      %v1394 = vsub.f32 %v1188, %v1277
      %v1395 = vsub.f32 %v1189, %v1277
      %v1396 = vsub.f32 %v1190, %v1277
      %v1397 = vsub.f32 %v1191, %v1277
      %v1398 = vsub.f32 %v1192, %v1277
      %v1399 = vsub.f32 %v1193, %v1277
      %v1400 = vsub.f32 %v1194, %v1277
      %v1401 = vsub.f32 %v1195, %v1277
      %v1402 = vsub.f32 %v1196, %v1277
      %v1403 = vsub.f32 %v1197, %v1277
      %v1404 = vsub.f32 %v1198, %v1277
      %v1405 = vsub.f32 %v1199, %v1277
      %v1406 = vsub.f32 %v1200, %v1277
      %v1407 = vsub.f32 %v1201, %v1277
      %v1408 = vsub.f32 %v1202, %v1277
      %v1409 = vsub.f32 %v1203, %v1277
      %v1410 = vsub.f32 %v1204, %v1277
      %v1411 = vsub.f32 %v1205, %v1277
      %v1412 = vsub.f32 %v1206, %v1277
      %v1413 = vsub.f32 %v1207, %v1277
      %v1414 = vadd.f32 %v1381, 1e-05
      %v1415 = vrsqrt.pop %v1414
      %v1416 = vmul.f32 %v1382, %v1415
      %v1417 = vmul.f32 %v1383, %v1415
      %v1418 = vmul.f32 %v1384, %v1415
      %v1419 = vmul.f32 %v1385, %v1415
      %v1420 = vmul.f32 %v1386, %v1415
      %v1421 = vmul.f32 %v1387, %v1415
      %v1422 = vmul.f32 %v1388, %v1415
      %v1423 = vmul.f32 %v1389, %v1415
      %v1424 = vmul.f32 %v1390, %v1415
      %v1425 = vmul.f32 %v1391, %v1415
      %v1426 = vmul.f32 %v1392, %v1415
      %v1427 = vmul.f32 %v1393, %v1415
      %v1428 = vmul.f32 %v1394, %v1415
      %v1429 = vmul.f32 %v1395, %v1415
      %v1430 = vmul.f32 %v1396, %v1415
      %v1431 = vmul.f32 %v1397, %v1415
      %v1432 = vmul.f32 %v1398, %v1415
      %v1433 = vmul.f32 %v1399, %v1415
      %v1434 = vmul.f32 %v1400, %v1415
      %v1435 = vmul.f32 %v1401, %v1415
      %v1436 = vmul.f32 %v1402, %v1415
      %v1437 = vmul.f32 %v1403, %v1415
      %v1438 = vmul.f32 %v1404, %v1415
      %v1439 = vmul.f32 %v1405, %v1415
      %v1440 = vmul.f32 %v1406, %v1415
      %v1441 = vmul.f32 %v1407, %v1415
      %v1442 = vmul.f32 %v1408, %v1415
      %v1443 = vmul.f32 %v1409, %v1415
      %v1444 = vmul.f32 %v1410, %v1415
      %v1445 = vmul.f32 %v1411, %v1415
      %v1446 = vmul.f32 %v1412, %v1415
      %v1447 = vmul.f32 %v1413, %v1415
      %v1448 = vmax.f32 %v1416, 0.0
      %v1449 = vmax.f32 %v1417, 0.0
      %v1450 = vmax.f32 %v1418, 0.0
      %v1451 = vmax.f32 %v1419, 0.0
      %v1452 = vmax.f32 %v1420, 0.0
      %v1453 = vmax.f32 %v1421, 0.0
      %v1454 = vmax.f32 %v1422, 0.0
      %v1455 = vmax.f32 %v1423, 0.0
      %v1456 = vmax.f32 %v1424, 0.0
      %v1457 = vmax.f32 %v1425, 0.0
      %v1458 = vmax.f32 %v1426, 0.0
      %v1459 = vmax.f32 %v1427, 0.0
      %v1460 = vmax.f32 %v1428, 0.0
      %v1461 = vmax.f32 %v1429, 0.0
      %v1462 = vmax.f32 %v1430, 0.0
      %v1463 = vmax.f32 %v1431, 0.0
      %v1464 = vmax.f32 %v1432, 0.0
      %v1465 = vmax.f32 %v1433, 0.0
      %v1466 = vmax.f32 %v1434, 0.0
      %v1467 = vmax.f32 %v1435, 0.0
      %v1468 = vmax.f32 %v1436, 0.0
      %v1469 = vmax.f32 %v1437, 0.0
      %v1470 = vmax.f32 %v1438, 0.0
      %v1471 = vmax.f32 %v1439, 0.0
      %v1472 = vmax.f32 %v1440, 0.0
      %v1473 = vmax.f32 %v1441, 0.0
      %v1474 = vmax.f32 %v1442, 0.0
      %v1475 = vmax.f32 %v1443, 0.0
      %v1476 = vmax.f32 %v1444, 0.0
      %v1477 = vmax.f32 %v1445, 0.0
      %v1478 = vmax.f32 %v1446, 0.0
      %v1479 = vmax.f32 %v1447, 0.0
      %v1480 = vrot.slane %v1448, 7
      %v1481 = vrot.slane %v1449, 7
      %v1482 = vrot.slane %v1450, 7
      %v1483 = vrot.slane %v1451, 7
      %v1484 = vrot.slane %v1452, 7
      %v1485 = vrot.slane %v1453, 7
      %v1486 = vrot.slane %v1454, 7
      %v1487 = vrot.slane %v1455, 7
      %v1488 = vrot.slane %v1456, 7
      %v1489 = vrot.slane %v1457, 7
      %v1490 = vrot.slane %v1458, 7
      %v1491 = vrot.slane %v1459, 7
      %v1492 = vrot.slane %v1460, 7
      %v1493 = vrot.slane %v1461, 7
      %v1494 = vrot.slane %v1462, 7
      %v1495 = vrot.slane %v1463, 7
      %v1496 = vrot.slane %v1464, 7
      %v1497 = vrot.slane %v1465, 7
      %v1498 = vrot.slane %v1466, 7
      %v1499 = vrot.slane %v1467, 7
      %v1500 = vrot.slane %v1468, 7
      %v1501 = vrot.slane %v1469, 7
      %v1502 = vrot.slane %v1470, 7
      %v1503 = vrot.slane %v1471, 7
      %v1504 = vrot.slane %v1472, 7
      %v1505 = vrot.slane %v1473, 7
      %v1506 = vrot.slane %v1474, 7
      %v1507 = vrot.slane %v1475, 7
      %v1508 = vrot.slane %v1476, 7
      %v1509 = vrot.slane %v1477, 7
      %v1510 = vrot.slane %v1478, 7
      %v1511 = vrot.slane %v1479, 7
      %v1512 = vsel %vm243, %v1510, %v1511
      %v1513 = vsel %vm243, %v1509, %v1510
      %v1514 = vsel %vm243, %v1508, %v1509
      %v1515 = vsel %vm243, %v1507, %v1508
      %v1516 = vsel %vm243, %v1506, %v1507
      %v1517 = vsel %vm243, %v1505, %v1506
      %v1518 = vsel %vm243, %v1504, %v1505
      %v1519 = vsel %vm243, %v1503, %v1504
      %v1520 = vsel %vm243, %v1502, %v1503
      %v1521 = vsel %vm243, %v1501, %v1502
      %v1522 = vsel %vm243, %v1500, %v1501
      %v1523 = vsel %vm243, %v1499, %v1500
      %v1524 = vsel %vm243, %v1498, %v1499
      %v1525 = vsel %vm243, %v1497, %v1498
      %v1526 = vsel %vm243, %v1496, %v1497
      %v1527 = vsel %vm243, %v1495, %v1496
      %v1528 = vsel %vm243, %v1494, %v1495
      %v1529 = vsel %vm243, %v1493, %v1494
      %v1530 = vsel %vm243, %v1492, %v1493
      %v1531 = vsel %vm243, %v1491, %v1492
      %v1532 = vsel %vm243, %v1490, %v1491
      %v1533 = vsel %vm243, %v1489, %v1490
      %v1534 = vsel %vm243, %v1488, %v1489
      %v1535 = vsel %vm243, %v1487, %v1488
      %v1536 = vsel %vm243, %v1486, %v1487
      %v1537 = vsel %vm243, %v1485, %v1486
      %v1538 = vsel %vm243, %v1484, %v1485
      %v1539 = vsel %vm243, %v1483, %v1484
      %v1540 = vsel %vm243, %v1482, %v1483
      %v1541 = vsel %vm243, %v1481, %v1482
      %v1542 = vsel %vm243, %v1480, %v1481
      %v1543 = vsel %vm243, %v1511, %v1480
      %v1544 = vrot.slane %v1448, 1
      %v1545 = vrot.slane %v1449, 1
      %v1546 = vrot.slane %v1450, 1
      %v1547 = vrot.slane %v1451, 1
      %v1548 = vrot.slane %v1452, 1
      %v1549 = vrot.slane %v1453, 1
      %v1550 = vrot.slane %v1454, 1
      %v1551 = vrot.slane %v1455, 1
      %v1552 = vrot.slane %v1456, 1
      %v1553 = vrot.slane %v1457, 1
      %v1554 = vrot.slane %v1458, 1
      %v1555 = vrot.slane %v1459, 1
      %v1556 = vrot.slane %v1460, 1
      %v1557 = vrot.slane %v1461, 1
      %v1558 = vrot.slane %v1462, 1
      %v1559 = vrot.slane %v1463, 1
      %v1560 = vrot.slane %v1464, 1
      %v1561 = vrot.slane %v1465, 1
      %v1562 = vrot.slane %v1466, 1
      %v1563 = vrot.slane %v1467, 1
      %v1564 = vrot.slane %v1468, 1
      %v1565 = vrot.slane %v1469, 1
      %v1566 = vrot.slane %v1470, 1
      %v1567 = vrot.slane %v1471, 1
      %v1568 = vrot.slane %v1472, 1
      %v1569 = vrot.slane %v1473, 1
      %v1570 = vrot.slane %v1474, 1
      %v1571 = vrot.slane %v1475, 1
      %v1572 = vrot.slane %v1476, 1
      %v1573 = vrot.slane %v1477, 1
      %v1574 = vrot.slane %v1478, 1
      %v1575 = vrot.slane %v1479, 1
      %v1576 = vsel %vm308, %v1574, %v1575
      %v1577 = vsel %vm308, %v1573, %v1574
      %v1578 = vsel %vm308, %v1572, %v1573
      %v1579 = vsel %vm308, %v1571, %v1572
      %v1580 = vsel %vm308, %v1570, %v1571
      %v1581 = vsel %vm308, %v1569, %v1570
      %v1582 = vsel %vm308, %v1568, %v1569
      %v1583 = vsel %vm308, %v1567, %v1568
      %v1584 = vsel %vm308, %v1566, %v1567
      %v1585 = vsel %vm308, %v1565, %v1566
      %v1586 = vsel %vm308, %v1564, %v1565
      %v1587 = vsel %vm308, %v1563, %v1564
      %v1588 = vsel %vm308, %v1562, %v1563
      %v1589 = vsel %vm308, %v1561, %v1562
      %v1590 = vsel %vm308, %v1560, %v1561
      %v1591 = vsel %vm308, %v1559, %v1560
      %v1592 = vsel %vm308, %v1558, %v1559
      %v1593 = vsel %vm308, %v1557, %v1558
      %v1594 = vsel %vm308, %v1556, %v1557
      %v1595 = vsel %vm308, %v1555, %v1556
      %v1596 = vsel %vm308, %v1554, %v1555
      %v1597 = vsel %vm308, %v1553, %v1554
      %v1598 = vsel %vm308, %v1552, %v1553
      %v1599 = vsel %vm308, %v1551, %v1552
      %v1600 = vsel %vm308, %v1550, %v1551
      %v1601 = vsel %vm308, %v1549, %v1550
      %v1602 = vsel %vm308, %v1548, %v1549
      %v1603 = vsel %vm308, %v1547, %v1548
      %v1604 = vsel %vm308, %v1546, %v1547
      %v1605 = vsel %vm308, %v1545, %v1546
      %v1606 = vsel %vm308, %v1544, %v1545
      %v1607 = vsel %vm308, %v1575, %v1544
      %v1608 = vsel %vm175, %v1606, %v1543
      %v1609 = vsel %vm176, %v1605, %v1542
      %v1610 = vsel %vm175, %v1604, %v1541
      %v1611 = vsel %vm176, %v1603, %v1540
      %v1612 = vsel %vm175, %v1602, %v1539
      %v1613 = vsel %vm176, %v1601, %v1538
      %v1614 = vsel %vm175, %v1600, %v1537
      %v1615 = vsel %vm176, %v1599, %v1536
      %v1616 = vsel %vm175, %v1598, %v1535
      %v1617 = vsel %vm176, %v1597, %v1534
      %v1618 = vsel %vm175, %v1596, %v1533
      %v1619 = vsel %vm176, %v1595, %v1532
      %v1620 = vsel %vm175, %v1594, %v1531
      %v1621 = vsel %vm176, %v1593, %v1530
      %v1622 = vsel %vm175, %v1592, %v1529
      %v1623 = vsel %vm176, %v1591, %v1528
      %v1624 = vsel %vm175, %v1590, %v1527
      %v1625 = vsel %vm176, %v1589, %v1526
      %v1626 = vsel %vm175, %v1588, %v1525
      %v1627 = vsel %vm176, %v1587, %v1524
      %v1628 = vsel %vm175, %v1586, %v1523
      %v1629 = vsel %vm176, %v1585, %v1522
      %v1630 = vsel %vm175, %v1584, %v1521
      %v1631 = vsel %vm176, %v1583, %v1520
      %v1632 = vsel %vm175, %v1582, %v1519
      %v1633 = vsel %vm176, %v1581, %v1518
      %v1634 = vsel %vm175, %v1580, %v1517
      %v1635 = vsel %vm176, %v1579, %v1516
      %v1636 = vsel %vm175, %v1578, %v1515
      %v1637 = vsel %vm176, %v1577, %v1514
      %v1638 = vsel %vm175, %v1576, %v1513
      %v1639 = vsel %vm176, %v1607, %v1512
      %v1640 = vsel %vm177, %v1543, %v1606
      %v1641 = vsel %vm178, %v1542, %v1605
      %v1642 = vsel %vm177, %v1541, %v1604
      %v1643 = vsel %vm178, %v1540, %v1603
      %v1644 = vsel %vm177, %v1539, %v1602
      %v1645 = vsel %vm178, %v1538, %v1601
      %v1646 = vsel %vm177, %v1537, %v1600
      %v1647 = vsel %vm178, %v1536, %v1599
      %v1648 = vsel %vm177, %v1535, %v1598
      %v1649 = vsel %vm178, %v1534, %v1597
      %v1650 = vsel %vm177, %v1533, %v1596
      %v1651 = vsel %vm178, %v1532, %v1595
      %v1652 = vsel %vm177, %v1531, %v1594
      %v1653 = vsel %vm178, %v1530, %v1593
      %v1654 = vsel %vm177, %v1529, %v1592
      %v1655 = vsel %vm178, %v1528, %v1591
      %v1656 = vsel %vm177, %v1527, %v1590
      %v1657 = vsel %vm178, %v1526, %v1589
      %v1658 = vsel %vm177, %v1525, %v1588
      %v1659 = vsel %vm178, %v1524, %v1587
      %v1660 = vsel %vm177, %v1523, %v1586
      %v1661 = vsel %vm178, %v1522, %v1585
      %v1662 = vsel %vm177, %v1521, %v1584
      %v1663 = vsel %vm178, %v1520, %v1583
      %v1664 = vsel %vm177, %v1519, %v1582
      %v1665 = vsel %vm178, %v1518, %v1581
      %v1666 = vsel %vm177, %v1517, %v1580
      %v1667 = vsel %vm178, %v1516, %v1579
      %v1668 = vsel %vm177, %v1515, %v1578
      %v1669 = vsel %vm178, %v1514, %v1577
      %v1670 = vsel %vm177, %v1513, %v1576
      %v1671 = vsel %vm178, %v1512, %v1607
      %v1672 = vpack.c.bf16 %v1609, %v1608
      %v1673 = vpack.c.bf16 %v1611, %v1610
      %v1674 = vpack.c.bf16 %v1613, %v1612
      %v1675 = vpack.c.bf16 %v1615, %v1614
      %v1676 = vpack.c.bf16 %v1617, %v1616
      %v1677 = vpack.c.bf16 %v1619, %v1618
      %v1678 = vpack.c.bf16 %v1621, %v1620
      %v1679 = vpack.c.bf16 %v1623, %v1622
      %v1680 = vpack.c.bf16 %v1625, %v1624
      %v1681 = vpack.c.bf16 %v1627, %v1626
      %v1682 = vpack.c.bf16 %v1629, %v1628
      %v1683 = vpack.c.bf16 %v1631, %v1630
      %v1684 = vpack.c.bf16 %v1633, %v1632
      %v1685 = vpack.c.bf16 %v1635, %v1634
      %v1686 = vpack.c.bf16 %v1637, %v1636
      %v1687 = vpack.c.bf16 %v1639, %v1638
      %v1688 = vpack.c.bf16 %v1449, %v1448
      %v1689 = vpack.c.bf16 %v1451, %v1450
      %v1690 = vpack.c.bf16 %v1453, %v1452
      %v1691 = vpack.c.bf16 %v1455, %v1454
      %v1692 = vpack.c.bf16 %v1457, %v1456
      %v1693 = vpack.c.bf16 %v1459, %v1458
      %v1694 = vpack.c.bf16 %v1461, %v1460
      %v1695 = vpack.c.bf16 %v1463, %v1462
      %v1696 = vpack.c.bf16 %v1465, %v1464
      %v1697 = vpack.c.bf16 %v1467, %v1466
      %v1698 = vpack.c.bf16 %v1469, %v1468
      %v1699 = vpack.c.bf16 %v1471, %v1470
      %v1700 = vpack.c.bf16 %v1473, %v1472
      %v1701 = vpack.c.bf16 %v1475, %v1474
      %v1702 = vpack.c.bf16 %v1477, %v1476
      %v1703 = vpack.c.bf16 %v1479, %v1478
      %v1704 = vpack.c.bf16 %v1641, %v1640
      %v1705 = vpack.c.bf16 %v1643, %v1642
      %v1706 = vpack.c.bf16 %v1645, %v1644
      %v1707 = vpack.c.bf16 %v1647, %v1646
      %v1708 = vpack.c.bf16 %v1649, %v1648
      %v1709 = vpack.c.bf16 %v1651, %v1650
      %v1710 = vpack.c.bf16 %v1653, %v1652
      %v1711 = vpack.c.bf16 %v1655, %v1654
      %v1712 = vpack.c.bf16 %v1657, %v1656
      %v1713 = vpack.c.bf16 %v1659, %v1658
      %v1714 = vpack.c.bf16 %v1661, %v1660
      %v1715 = vpack.c.bf16 %v1663, %v1662
      %v1716 = vpack.c.bf16 %v1665, %v1664
      %v1717 = vpack.c.bf16 %v1667, %v1666
      %v1718 = vpack.c.bf16 %v1669, %v1668
      %v1719 = vpack.c.bf16 %v1671, %v1670
      %1736 = vrot.lane.b32.xlu0 %v1688, 4
      %v1737 = vpop.permute.xlu0 %1736
      %1738 = vrot.lane.b32.xlu0 %v1689, 4
      %v1739 = vpop.permute.xlu0 %1738
      %1740 = vrot.lane.b32.xlu0 %v1690, 4
      %v1741 = vpop.permute.xlu0 %1740
      %1742 = vrot.lane.b32.xlu0 %v1691, 4
      %v1743 = vpop.permute.xlu0 %1742
      %1744 = vrot.lane.b32.xlu0 %v1692, 4
      %v1745 = vpop.permute.xlu0 %1744
      %1746 = vrot.lane.b32.xlu0 %v1693, 4
      %v1747 = vpop.permute.xlu0 %1746
      %1748 = vrot.lane.b32.xlu0 %v1694, 4
      %v1749 = vpop.permute.xlu0 %1748
      %1750 = vrot.lane.b32.xlu0 %v1695, 4
      %v1751 = vpop.permute.xlu0 %1750
      %1752 = vrot.lane.b32.xlu0 %v1696, 4
      %v1753 = vpop.permute.xlu0 %1752
      %1754 = vrot.lane.b32.xlu0 %v1697, 4
      %v1755 = vpop.permute.xlu0 %1754
      %1756 = vrot.lane.b32.xlu0 %v1698, 4
      %v1757 = vpop.permute.xlu0 %1756
      %1758 = vrot.lane.b32.xlu0 %v1699, 4
      %v1759 = vpop.permute.xlu0 %1758
      %1760 = vrot.lane.b32.xlu0 %v1700, 4
      %v1761 = vpop.permute.xlu0 %1760
      %1762 = vrot.lane.b32.xlu0 %v1701, 4
      %v1763 = vpop.permute.xlu0 %1762
      %1764 = vrot.lane.b32.xlu0 %v1702, 4
      %v1765 = vpop.permute.xlu0 %1764
      %1766 = vrot.lane.b32.xlu0 %v1703, 4
      %v1767 = vpop.permute.xlu0 %1766
      %1784 = vrot.lane.b32.xlu0 %v1704, 8
      %v1785 = vpop.permute.xlu0 %1784
      %1786 = vrot.lane.b32.xlu0 %v1705, 8
      %v1787 = vpop.permute.xlu0 %1786
      %1788 = vrot.lane.b32.xlu0 %v1706, 8
      %v1789 = vpop.permute.xlu0 %1788
      %1790 = vrot.lane.b32.xlu0 %v1707, 8
      %v1791 = vpop.permute.xlu0 %1790
      %1792 = vrot.lane.b32.xlu0 %v1708, 8
      %v1793 = vpop.permute.xlu0 %1792
      %1794 = vrot.lane.b32.xlu0 %v1709, 8
      %v1795 = vpop.permute.xlu0 %1794
      %1796 = vrot.lane.b32.xlu0 %v1710, 8
      %v1797 = vpop.permute.xlu0 %1796
      %1798 = vrot.lane.b32.xlu0 %v1711, 8
      %v1799 = vpop.permute.xlu0 %1798
      %1800 = vrot.lane.b32.xlu0 %v1712, 8
      %v1801 = vpop.permute.xlu0 %1800
      %1802 = vrot.lane.b32.xlu0 %v1713, 8
      %v1803 = vpop.permute.xlu0 %1802
      %1804 = vrot.lane.b32.xlu0 %v1714, 8
      %v1805 = vpop.permute.xlu0 %1804
      %1806 = vrot.lane.b32.xlu0 %v1715, 8
      %v1807 = vpop.permute.xlu0 %1806
      %1808 = vrot.lane.b32.xlu0 %v1716, 8
      %v1809 = vpop.permute.xlu0 %1808
      %1810 = vrot.lane.b32.xlu0 %v1717, 8
      %v1811 = vpop.permute.xlu0 %1810
      %1812 = vrot.lane.b32.xlu0 %v1718, 8
      %v1813 = vpop.permute.xlu0 %1812
      %1814 = vrot.lane.b32.xlu0 %v1719, 8
      %v1815 = vpop.permute.xlu0 %1814
      %v1818 = vsel %vm549, %v1672, %v1737
      %v1821 = vsel %vm549, %v1673, %v1739
      %v1824 = vsel %vm549, %v1674, %v1741
      %v1827 = vsel %vm549, %v1675, %v1743
      %v1830 = vsel %vm549, %v1676, %v1745
      %v1833 = vsel %vm549, %v1677, %v1747
      %v1836 = vsel %vm549, %v1678, %v1749
      %v1839 = vsel %vm549, %v1679, %v1751
      %v1842 = vsel %vm549, %v1680, %v1753
      %v1845 = vsel %vm549, %v1681, %v1755
      %v1848 = vsel %vm549, %v1682, %v1757
      %v1851 = vsel %vm549, %v1683, %v1759
      %v1854 = vsel %vm549, %v1684, %v1761
      %v1857 = vsel %vm549, %v1685, %v1763
      %v1860 = vsel %vm549, %v1686, %v1765
      %v1863 = vsel %vm549, %v1687, %v1767
      %v1865 = vsel %vm598, %v1818, %v1785
      %v1867 = vsel %vm598, %v1821, %v1787
      %v1869 = vsel %vm598, %v1824, %v1789
      %v1871 = vsel %vm598, %v1827, %v1791
      %v1873 = vsel %vm598, %v1830, %v1793
      %v1875 = vsel %vm598, %v1833, %v1795
      %v1877 = vsel %vm598, %v1836, %v1797
      %v1879 = vsel %vm598, %v1839, %v1799
      %v1881 = vsel %vm598, %v1842, %v1801
      %v1883 = vsel %vm598, %v1845, %v1803
      %v1885 = vsel %vm598, %v1848, %v1805
      %v1887 = vsel %vm598, %v1851, %v1807
      %v1889 = vsel %vm598, %v1854, %v1809
      %v1891 = vsel %vm598, %v1857, %v1811
      %v1893 = vsel %vm598, %v1860, %v1813
      %v1895 = vsel %vm598, %v1863, %v1815
      %s1896 = scalar_lea.vmem %s2, 8
      %v1897 = vld [vmem:[%s1896] sm:$0xf]
      %v1898 = vld [vmem:[%s1896 + $0x4] sm:$0x3]
      %v1899 = vld [vmem:[%s2] sm:$0xf]
      %v1900 = vld [vmem:[%s2 + $0x4] sm:$0x3]
      %v1903 = vunpack.c.l.b16 %v1899
      %v1904 = vunpack.c.l.b16 %v1900
      %v1905 = vpack.c.b16 %v1904, %v1903
      %v1906 = vsel %vm641, %v1865, 0
      %v1908 = vsel %vm641, %v1867, 0
      %v1910 = vsel %vm641, %v1869, 0
      %v1912 = vsel %vm641, %v1871, 0
      %v1914 = vsel %vm641, %v1873, 0
      %v1916 = vsel %vm641, %v1875, 0
      %v1918 = vsel %vm641, %v1877, 0
      %v1920 = vsel %vm641, %v1879, 0
      %v1922 = vsel %vm641, %v1881, 0
      %v1924 = vsel %vm641, %v1883, 0
      %v1926 = vsel %vm641, %v1885, 0
      %v1928 = vsel %vm641, %v1887, 0
      %v1930 = vsel %vm641, %v1889, 0
      %v1932 = vsel %vm641, %v1891, 0
      %v1934 = vsel %vm641, %v1893, 0
      %v1936 = vsel %vm641, %v1895, 0
      %v1939 = vsel %vm674, %v1905, 0
      %1941 = vmatprep.subr.bf16.mxu0 0
      %1942 = vmatpush1.bf16.msra.mxu0 0
      %1943 = vmatprep.subr.bf16.mxu0 0
      %1944 = vmatpush1.bf16.msra.mxu0 0
      %1945 = vmatprep.subr.bf16.mxu0 0
      %1946 = vmatpush1.bf16.msra.mxu0 0
      %1947 = vmatprep.subr.bf16.mxu0 0
      %1948 = vmatpush1.bf16.msra.mxu0 0
      %1949 = vmatprep.subr.bf16.mxu0 0
      %1950 = vmatpush1.bf16.msra.mxu0 0
      %1951 = vmatprep.subr.bf16.mxu0 0
      %1952 = vmatpush1.bf16.msra.mxu0 0
      %1953 = vmatprep.subr.bf16.mxu0 0
      %1954 = vmatpush1.bf16.msra.mxu0 0
      %1955 = vmatprep.subr.bf16.mxu0 0
      %1956 = vmatpush1.bf16.msra.mxu0 %v1939
      %1957 = vmatprep.subr.bf16.mxu0 0
      %1958 = vmatpush2.bf16.msra.mxu0 0
      %1959 = vmatprep.subr.bf16.mxu0 0
      %1960 = vmatpush2.bf16.msra.mxu0 0
      %1961 = vmatprep.subr.bf16.mxu0 0
      %1962 = vmatpush2.bf16.msra.mxu0 0
      %1963 = vmatprep.subr.bf16.mxu0 0
      %1964 = vmatpush2.bf16.msra.mxu0 0
      %1965 = vmatprep.subr.bf16.mxu0 0
      %1966 = vmatpush2.bf16.msra.mxu0 0
      %1967 = vmatprep.subr.bf16.mxu0 0
      %1968 = vmatpush2.bf16.msra.mxu0 0
      %1969 = vmatprep.subr.bf16.mxu0 0
      %1970 = vmatpush2.bf16.msra.mxu0 0
      %1971 = vmatprep.subr.bf16.mxu0 0
      %1972 = vmatpush2.bf16.msra.mxu0 0
      %1973 = vmatprep.mubr.bf16.mxu0 0
      %1974 = vmatmul.mubr.bf16.gmra.mxu0 %v1906
      %v1975 = vpop.f32.mrf.mxu0
      %v1976 = vadd.f32 0.0, %v1975
      %v1977 = vpop.f32.mrf.mxu0
      %v1978 = vpop.f32.mrf.mxu0
      %v1979 = vadd.f32 0.0, %v1978
      %v1980 = vpop.f32.mrf.mxu0
      %1981 = vmatprep.mubr.bf16.mxu0 0
      %1982 = vmatmul.mubr.bf16.gmra.mxu0 %v1908
      %v1983 = vpop.f32.mrf.mxu0
      %v1984 = vadd.f32 0.0, %v1983
      %v1985 = vpop.f32.mrf.mxu0
      %v1986 = vpop.f32.mrf.mxu0
      %v1987 = vadd.f32 0.0, %v1986
      %v1988 = vpop.f32.mrf.mxu0
      %1989 = vmatprep.mubr.bf16.mxu0 0
      %1990 = vmatmul.mubr.bf16.gmra.mxu0 %v1910
      %v1991 = vpop.f32.mrf.mxu0
      %v1992 = vadd.f32 0.0, %v1991
      %v1993 = vpop.f32.mrf.mxu0
      %v1994 = vpop.f32.mrf.mxu0
      %v1995 = vadd.f32 0.0, %v1994
      %v1996 = vpop.f32.mrf.mxu0
      %1997 = vmatprep.mubr.bf16.mxu0 0
      %1998 = vmatmul.mubr.bf16.gmra.mxu0 %v1912
      %v1999 = vpop.f32.mrf.mxu0
      %v2000 = vadd.f32 0.0, %v1999
      %v2001 = vpop.f32.mrf.mxu0
      %v2002 = vpop.f32.mrf.mxu0
      %v2003 = vadd.f32 0.0, %v2002
      %v2004 = vpop.f32.mrf.mxu0
      %2005 = vmatprep.mubr.bf16.mxu0 0
      %2006 = vmatmul.mubr.bf16.gmra.mxu0 %v1914
      %v2007 = vpop.f32.mrf.mxu0
      %v2008 = vadd.f32 0.0, %v2007
      %v2009 = vpop.f32.mrf.mxu0
      %v2010 = vpop.f32.mrf.mxu0
      %v2011 = vadd.f32 0.0, %v2010
      %v2012 = vpop.f32.mrf.mxu0
      %2013 = vmatprep.mubr.bf16.mxu0 0
      %2014 = vmatmul.mubr.bf16.gmra.mxu0 %v1916
      %v2015 = vpop.f32.mrf.mxu0
      %v2016 = vadd.f32 0.0, %v2015
      %v2017 = vpop.f32.mrf.mxu0
      %v2018 = vpop.f32.mrf.mxu0
      %v2019 = vadd.f32 0.0, %v2018
      %v2020 = vpop.f32.mrf.mxu0
      %2021 = vmatprep.mubr.bf16.mxu0 0
      %2022 = vmatmul.mubr.bf16.gmra.mxu0 %v1918
      %v2023 = vpop.f32.mrf.mxu0
      %v2024 = vadd.f32 0.0, %v2023
      %v2025 = vpop.f32.mrf.mxu0
      %v2026 = vpop.f32.mrf.mxu0
      %v2027 = vadd.f32 0.0, %v2026
      %v2028 = vpop.f32.mrf.mxu0
      %2029 = vmatprep.mubr.bf16.mxu0 0
      %2030 = vmatmul.mubr.bf16.gmra.mxu0 %v1920
      %v2031 = vpop.f32.mrf.mxu0
      %v2032 = vadd.f32 0.0, %v2031
      %v2033 = vpop.f32.mrf.mxu0
      %v2034 = vpop.f32.mrf.mxu0
      %v2035 = vadd.f32 0.0, %v2034
      %v2036 = vpop.f32.mrf.mxu0
      %2037 = vmatprep.mubr.bf16.mxu0 0
      %2038 = vmatmul.mubr.bf16.gmra.mxu0 %v1922
      %v2039 = vpop.f32.mrf.mxu0
      %v2040 = vadd.f32 0.0, %v2039
      %v2041 = vpop.f32.mrf.mxu0
      %v2042 = vpop.f32.mrf.mxu0
      %v2043 = vadd.f32 0.0, %v2042
      %v2044 = vpop.f32.mrf.mxu0
      %2045 = vmatprep.mubr.bf16.mxu0 0
      %2046 = vmatmul.mubr.bf16.gmra.mxu0 %v1924
      %v2047 = vpop.f32.mrf.mxu0
      %v2048 = vadd.f32 0.0, %v2047
      %v2049 = vpop.f32.mrf.mxu0
      %v2050 = vpop.f32.mrf.mxu0
      %v2051 = vadd.f32 0.0, %v2050
      %v2052 = vpop.f32.mrf.mxu0
      %2053 = vmatprep.mubr.bf16.mxu0 0
      %2054 = vmatmul.mubr.bf16.gmra.mxu0 %v1926
      %v2055 = vpop.f32.mrf.mxu0
      %v2056 = vadd.f32 0.0, %v2055
      %v2057 = vpop.f32.mrf.mxu0
      %v2058 = vpop.f32.mrf.mxu0
      %v2059 = vadd.f32 0.0, %v2058
      %v2060 = vpop.f32.mrf.mxu0
      %2061 = vmatprep.mubr.bf16.mxu0 0
      %2062 = vmatmul.mubr.bf16.gmra.mxu0 %v1928
      %v2063 = vpop.f32.mrf.mxu0
      %v2064 = vadd.f32 0.0, %v2063
      %v2065 = vpop.f32.mrf.mxu0
      %v2066 = vpop.f32.mrf.mxu0
      %v2067 = vadd.f32 0.0, %v2066
      %v2068 = vpop.f32.mrf.mxu0
      %2069 = vmatprep.mubr.bf16.mxu0 0
      %2070 = vmatmul.mubr.bf16.gmra.mxu0 %v1930
      %v2071 = vpop.f32.mrf.mxu0
      %v2072 = vadd.f32 0.0, %v2071
      %v2073 = vpop.f32.mrf.mxu0
      %v2074 = vpop.f32.mrf.mxu0
      %v2075 = vadd.f32 0.0, %v2074
      %v2076 = vpop.f32.mrf.mxu0
      %2077 = vmatprep.mubr.bf16.mxu0 0
      %2078 = vmatmul.mubr.bf16.gmra.mxu0 %v1932
      %v2079 = vpop.f32.mrf.mxu0
      %v2080 = vadd.f32 0.0, %v2079
      %v2081 = vpop.f32.mrf.mxu0
      %v2082 = vpop.f32.mrf.mxu0
      %v2083 = vadd.f32 0.0, %v2082
      %v2084 = vpop.f32.mrf.mxu0
      %2085 = vmatprep.mubr.bf16.mxu0 0
      %2086 = vmatmul.mubr.bf16.gmra.mxu0 %v1934
      %v2087 = vpop.f32.mrf.mxu0
      %v2088 = vadd.f32 0.0, %v2087
      %v2089 = vpop.f32.mrf.mxu0
      %v2090 = vpop.f32.mrf.mxu0
      %v2091 = vadd.f32 0.0, %v2090
      %v2092 = vpop.f32.mrf.mxu0
      %2093 = vmatprep.mubr.bf16.mxu0 0
      %2094 = vmatmul.mubr.bf16.gmra.mxu0 %v1936
      %v2095 = vpop.f32.mrf.mxu0
      %v2096 = vpop.f32.mrf.mxu0
      %v2097 = vpop.f32.mrf.mxu0
      %v2098 = vpop.f32.mrf.mxu0
      %2099 = vdwg.mxu0
      %s2100 = scalar_lea.vmem %s2, 16
      %v2101 = vld [vmem:[%s2100] sm:$0xf]
      %v2102 = vld [vmem:[%s2100 + $0x4] sm:$0x3]
      %v2105 = vunpack.c.l.b16 %v2101
      %v2106 = vunpack.c.l.b16 %v2102
      %v2107 = vpack.c.b16 %v2106, %v2105
      %v2109 = vsel %vm674, %v2107, 0
      %2111 = vmatprep.subr.bf16.mxu0 0
      %2112 = vmatpush1.bf16.msra.mxu0 0
      %2113 = vmatprep.subr.bf16.mxu0 0
      %2114 = vmatpush1.bf16.msra.mxu0 0
      %2115 = vmatprep.subr.bf16.mxu0 0
      %2116 = vmatpush1.bf16.msra.mxu0 0
      %2117 = vmatprep.subr.bf16.mxu0 0
      %2118 = vmatpush1.bf16.msra.mxu0 0
      %2119 = vmatprep.subr.bf16.mxu0 0
      %2120 = vmatpush1.bf16.msra.mxu0 0
      %2121 = vmatprep.subr.bf16.mxu0 0
      %2122 = vmatpush1.bf16.msra.mxu0 0
      %2123 = vmatprep.subr.bf16.mxu0 0
      %2124 = vmatpush1.bf16.msra.mxu0 0
      %2125 = vmatprep.subr.bf16.mxu0 0
      %2126 = vmatpush1.bf16.msra.mxu0 %v2109
      %2127 = vmatprep.subr.bf16.mxu0 0
      %2128 = vmatpush2.bf16.msra.mxu0 0
      %2129 = vmatprep.subr.bf16.mxu0 0
      %2130 = vmatpush2.bf16.msra.mxu0 0
      %2131 = vmatprep.subr.bf16.mxu0 0
      %2132 = vmatpush2.bf16.msra.mxu0 0
      %2133 = vmatprep.subr.bf16.mxu0 0
      %2134 = vmatpush2.bf16.msra.mxu0 0
      %2135 = vmatprep.subr.bf16.mxu0 0
      %2136 = vmatpush2.bf16.msra.mxu0 0
      %2137 = vmatprep.subr.bf16.mxu0 0
      %2138 = vmatpush2.bf16.msra.mxu0 0
      %2139 = vmatprep.subr.bf16.mxu0 0
      %2140 = vmatpush2.bf16.msra.mxu0 0
      %2141 = vmatprep.subr.bf16.mxu0 0
      %2142 = vmatpush2.bf16.msra.mxu0 0
      %2143 = vmatprep.mubr.bf16.mxu0 0
      %2144 = vmatmul.mubr.bf16.gmra.mxu0 %v1906
      %v2145 = vpop.f32.mrf.mxu0
      %v2146 = vpop.f32.mrf.mxu0
      %v2147 = vpop.f32.mrf.mxu0
      %v2148 = vpop.f32.mrf.mxu0
      %2149 = vmatprep.mubr.bf16.mxu0 0
      %2150 = vmatmul.mubr.bf16.gmra.mxu0 %v1908
      %v2151 = vpop.f32.mrf.mxu0
      %v2152 = vadd.f32 0.0, %v2151
      %v2153 = vpop.f32.mrf.mxu0
      %v2154 = vpop.f32.mrf.mxu0
      %v2155 = vadd.f32 0.0, %v2154
      %v2156 = vpop.f32.mrf.mxu0
      %2157 = vmatprep.mubr.bf16.mxu0 0
      %2158 = vmatmul.mubr.bf16.gmra.mxu0 %v1910
      %v2159 = vpop.f32.mrf.mxu0
      %v2160 = vadd.f32 0.0, %v2159
      %v2161 = vpop.f32.mrf.mxu0
      %v2162 = vpop.f32.mrf.mxu0
      %v2163 = vadd.f32 0.0, %v2162
      %v2164 = vpop.f32.mrf.mxu0
      %2165 = vmatprep.mubr.bf16.mxu0 0
      %2166 = vmatmul.mubr.bf16.gmra.mxu0 %v1912
      %v2167 = vpop.f32.mrf.mxu0
      %v2168 = vadd.f32 0.0, %v2167
      %v2169 = vpop.f32.mrf.mxu0
      %v2170 = vpop.f32.mrf.mxu0
      %v2171 = vadd.f32 0.0, %v2170
      %v2172 = vpop.f32.mrf.mxu0
      %2173 = vmatprep.mubr.bf16.mxu0 0
      %2174 = vmatmul.mubr.bf16.gmra.mxu0 %v1914
      %v2175 = vpop.f32.mrf.mxu0
      %v2176 = vadd.f32 0.0, %v2175
      %v2177 = vpop.f32.mrf.mxu0
      %v2178 = vpop.f32.mrf.mxu0
      %v2179 = vadd.f32 0.0, %v2178
      %v2180 = vpop.f32.mrf.mxu0
      %2181 = vmatprep.mubr.bf16.mxu0 0
      %2182 = vmatmul.mubr.bf16.gmra.mxu0 %v1916
      %v2183 = vpop.f32.mrf.mxu0
      %v2184 = vadd.f32 0.0, %v2183
      %v2185 = vpop.f32.mrf.mxu0
      %v2186 = vpop.f32.mrf.mxu0
      %v2187 = vadd.f32 0.0, %v2186
      %v2188 = vpop.f32.mrf.mxu0
      %2189 = vmatprep.mubr.bf16.mxu0 0
      %2190 = vmatmul.mubr.bf16.gmra.mxu0 %v1918
      %v2191 = vpop.f32.mrf.mxu0
      %v2192 = vadd.f32 0.0, %v2191
      %v2193 = vpop.f32.mrf.mxu0
      %v2194 = vpop.f32.mrf.mxu0
      %v2195 = vadd.f32 0.0, %v2194
      %v2196 = vpop.f32.mrf.mxu0
      %2197 = vmatprep.mubr.bf16.mxu0 0
      %2198 = vmatmul.mubr.bf16.gmra.mxu0 %v1920
      %v2199 = vpop.f32.mrf.mxu0
      %v2200 = vadd.f32 0.0, %v2199
      %v2201 = vpop.f32.mrf.mxu0
      %v2202 = vpop.f32.mrf.mxu0
      %v2203 = vadd.f32 0.0, %v2202
      %v2204 = vpop.f32.mrf.mxu0
      %2205 = vmatprep.mubr.bf16.mxu0 0
      %2206 = vmatmul.mubr.bf16.gmra.mxu0 %v1922
      %v2207 = vpop.f32.mrf.mxu0
      %v2208 = vadd.f32 0.0, %v2207
      %v2209 = vpop.f32.mrf.mxu0
      %v2210 = vpop.f32.mrf.mxu0
      %v2211 = vadd.f32 0.0, %v2210
      %v2212 = vpop.f32.mrf.mxu0
      %2213 = vmatprep.mubr.bf16.mxu0 0
      %2214 = vmatmul.mubr.bf16.gmra.mxu0 %v1924
      %v2215 = vpop.f32.mrf.mxu0
      %v2216 = vadd.f32 0.0, %v2215
      %v2217 = vpop.f32.mrf.mxu0
      %v2218 = vpop.f32.mrf.mxu0
      %v2219 = vadd.f32 0.0, %v2218
      %v2220 = vpop.f32.mrf.mxu0
      %2221 = vmatprep.mubr.bf16.mxu0 0
      %2222 = vmatmul.mubr.bf16.gmra.mxu0 %v1926
      %v2223 = vpop.f32.mrf.mxu0
      %v2224 = vadd.f32 0.0, %v2223
      %v2225 = vpop.f32.mrf.mxu0
      %v2226 = vpop.f32.mrf.mxu0
      %v2227 = vadd.f32 0.0, %v2226
      %v2228 = vpop.f32.mrf.mxu0
      %2229 = vmatprep.mubr.bf16.mxu0 0
      %2230 = vmatmul.mubr.bf16.gmra.mxu0 %v1928
      %v2231 = vpop.f32.mrf.mxu0
      %v2232 = vadd.f32 0.0, %v2231
      %v2233 = vpop.f32.mrf.mxu0
      %v2234 = vpop.f32.mrf.mxu0
      %v2235 = vadd.f32 0.0, %v2234
      %v2236 = vpop.f32.mrf.mxu0
      %2237 = vmatprep.mubr.bf16.mxu0 0
      %2238 = vmatmul.mubr.bf16.gmra.mxu0 %v1930
      %v2239 = vpop.f32.mrf.mxu0
      %v2240 = vadd.f32 0.0, %v2239
      %v2241 = vpop.f32.mrf.mxu0
      %v2242 = vpop.f32.mrf.mxu0
      %v2243 = vadd.f32 0.0, %v2242
      %v2244 = vpop.f32.mrf.mxu0
      %2245 = vmatprep.mubr.bf16.mxu0 0
      %2246 = vmatmul.mubr.bf16.gmra.mxu0 %v1932
      %v2247 = vpop.f32.mrf.mxu0
      %v2248 = vadd.f32 0.0, %v2247
      %v2249 = vpop.f32.mrf.mxu0
      %v2250 = vpop.f32.mrf.mxu0
      %v2251 = vadd.f32 0.0, %v2250
      %v2252 = vpop.f32.mrf.mxu0
      %2253 = vmatprep.mubr.bf16.mxu0 0
      %2254 = vmatmul.mubr.bf16.gmra.mxu0 %v1934
      %v2255 = vpop.f32.mrf.mxu0
      %v2256 = vadd.f32 0.0, %v2255
      %v2257 = vpop.f32.mrf.mxu0
      %v2258 = vpop.f32.mrf.mxu0
      %v2259 = vadd.f32 0.0, %v2258
      %v2260 = vpop.f32.mrf.mxu0
      %2261 = vmatprep.mubr.bf16.mxu0 0
      %2262 = vmatmul.mubr.bf16.gmra.mxu0 %v1936
      %v2263 = vpop.f32.mrf.mxu0
      %v2264 = vadd.f32 0.0, %v2263
      %v2265 = vpop.f32.mrf.mxu0
      %v2266 = vpop.f32.mrf.mxu0
      %v2267 = vadd.f32 0.0, %v2266
      %v2268 = vpop.f32.mrf.mxu0
      %2269 = vdwg.mxu0
      %v2272 = vunpack.c.l.b16 %v1897
      %v2273 = vunpack.c.l.b16 %v1898
      %v2274 = vpack.c.b16 %v2273, %v2272
      %v2276 = vsel %vm674, %v2274, 0
      %2278 = vmatprep.subr.bf16.mxu0 0
      %2279 = vmatpush1.bf16.msra.mxu0 0
      %2280 = vmatprep.subr.bf16.mxu0 0
      %2281 = vmatpush1.bf16.msra.mxu0 0
      %2282 = vmatprep.subr.bf16.mxu0 0
      %2283 = vmatpush1.bf16.msra.mxu0 0
      %2284 = vmatprep.subr.bf16.mxu0 0
      %2285 = vmatpush1.bf16.msra.mxu0 0
      %2286 = vmatprep.subr.bf16.mxu0 0
      %2287 = vmatpush1.bf16.msra.mxu0 0
      %2288 = vmatprep.subr.bf16.mxu0 0
      %2289 = vmatpush1.bf16.msra.mxu0 0
      %2290 = vmatprep.subr.bf16.mxu0 0
      %2291 = vmatpush1.bf16.msra.mxu0 0
      %2292 = vmatprep.subr.bf16.mxu0 0
      %2293 = vmatpush1.bf16.msra.mxu0 %v2276
      %2294 = vmatprep.subr.bf16.mxu0 0
      %2295 = vmatpush2.bf16.msra.mxu0 0
      %2296 = vmatprep.subr.bf16.mxu0 0
      %2297 = vmatpush2.bf16.msra.mxu0 0
      %2298 = vmatprep.subr.bf16.mxu0 0
      %2299 = vmatpush2.bf16.msra.mxu0 0
      %2300 = vmatprep.subr.bf16.mxu0 0
      %2301 = vmatpush2.bf16.msra.mxu0 0
      %2302 = vmatprep.subr.bf16.mxu0 0
      %2303 = vmatpush2.bf16.msra.mxu0 0
      %2304 = vmatprep.subr.bf16.mxu0 0
      %2305 = vmatpush2.bf16.msra.mxu0 0
      %2306 = vmatprep.subr.bf16.mxu0 0
      %2307 = vmatpush2.bf16.msra.mxu0 0
      %2308 = vmatprep.subr.bf16.mxu0 0
      %2309 = vmatpush2.bf16.msra.mxu0 0
      %2310 = vmatprep.mubr.bf16.mxu0 0
      %2311 = vmatmul.mubr.bf16.gmra.mxu0 %v1906
      %v2312 = vpop.f32.mrf.mxu0
      %v2313 = vadd.f32 %v1984, %v2312
      %v2314 = vpop.f32.mrf.mxu0
      %v2315 = vpop.f32.mrf.mxu0
      %v2316 = vadd.f32 %v1987, %v2315
      %v2317 = vpop.f32.mrf.mxu0
      %2318 = vmatprep.mubr.bf16.mxu0 0
      %2319 = vmatmul.mubr.bf16.gmra.mxu0 %v1908
      %v2320 = vpop.f32.mrf.mxu0
      %v2321 = vadd.f32 %v1976, %v2320
      %v2322 = vpop.f32.mrf.mxu0
      %v2323 = vpop.f32.mrf.mxu0
      %v2324 = vadd.f32 %v1979, %v2323
      %v2325 = vpop.f32.mrf.mxu0
      %2326 = vmatprep.mubr.bf16.mxu0 0
      %2327 = vmatmul.mubr.bf16.gmra.mxu0 %v1910
      %v2328 = vpop.f32.mrf.mxu0
      %v2329 = vadd.f32 %v1984, %v2328
      %v2330 = vpop.f32.mrf.mxu0
      %v2331 = vpop.f32.mrf.mxu0
      %v2332 = vadd.f32 %v1987, %v2331
      %v2333 = vpop.f32.mrf.mxu0
      %2334 = vmatprep.mubr.bf16.mxu0 0
      %2335 = vmatmul.mubr.bf16.gmra.mxu0 %v1912
      %v2336 = vpop.f32.mrf.mxu0
      %v2337 = vadd.f32 %v1992, %v2336
      %v2338 = vpop.f32.mrf.mxu0
      %v2339 = vpop.f32.mrf.mxu0
      %v2340 = vadd.f32 %v1995, %v2339
      %v2341 = vpop.f32.mrf.mxu0
      %2342 = vmatprep.mubr.bf16.mxu0 0
      %2343 = vmatmul.mubr.bf16.gmra.mxu0 %v1914
      %v2344 = vpop.f32.mrf.mxu0
      %v2345 = vadd.f32 %v2000, %v2344
      %v2346 = vpop.f32.mrf.mxu0
      %v2347 = vpop.f32.mrf.mxu0
      %v2348 = vadd.f32 %v2003, %v2347
      %v2349 = vpop.f32.mrf.mxu0
      %2350 = vmatprep.mubr.bf16.mxu0 0
      %2351 = vmatmul.mubr.bf16.gmra.mxu0 %v1916
      %v2352 = vpop.f32.mrf.mxu0
      %v2353 = vadd.f32 %v2008, %v2352
      %v2354 = vpop.f32.mrf.mxu0
      %v2355 = vpop.f32.mrf.mxu0
      %v2356 = vadd.f32 %v2011, %v2355
      %v2357 = vpop.f32.mrf.mxu0
      %2358 = vmatprep.mubr.bf16.mxu0 0
      %2359 = vmatmul.mubr.bf16.gmra.mxu0 %v1918
      %v2360 = vpop.f32.mrf.mxu0
      %v2361 = vadd.f32 %v2016, %v2360
      %v2362 = vpop.f32.mrf.mxu0
      %v2363 = vpop.f32.mrf.mxu0
      %v2364 = vadd.f32 %v2019, %v2363
      %v2365 = vpop.f32.mrf.mxu0
      %2366 = vmatprep.mubr.bf16.mxu0 0
      %2367 = vmatmul.mubr.bf16.gmra.mxu0 %v1920
      %v2368 = vpop.f32.mrf.mxu0
      %v2369 = vadd.f32 %v2024, %v2368
      %v2370 = vpop.f32.mrf.mxu0
      %v2371 = vpop.f32.mrf.mxu0
      %v2372 = vadd.f32 %v2027, %v2371
      %v2373 = vpop.f32.mrf.mxu0
      %2374 = vmatprep.mubr.bf16.mxu0 0
      %2375 = vmatmul.mubr.bf16.gmra.mxu0 %v1922
      %v2376 = vpop.f32.mrf.mxu0
      %v2377 = vadd.f32 %v2032, %v2376
      %v2378 = vpop.f32.mrf.mxu0
      %v2379 = vpop.f32.mrf.mxu0
      %v2380 = vadd.f32 %v2035, %v2379
      %v2381 = vpop.f32.mrf.mxu0
      %2382 = vmatprep.mubr.bf16.mxu0 0
      %2383 = vmatmul.mubr.bf16.gmra.mxu0 %v1924
      %v2384 = vpop.f32.mrf.mxu0
      %v2385 = vadd.f32 %v2040, %v2384
      %v2386 = vpop.f32.mrf.mxu0
      %v2387 = vpop.f32.mrf.mxu0
      %v2388 = vadd.f32 %v2043, %v2387
      %v2389 = vpop.f32.mrf.mxu0
      %2390 = vmatprep.mubr.bf16.mxu0 0
      %2391 = vmatmul.mubr.bf16.gmra.mxu0 %v1926
      %v2392 = vpop.f32.mrf.mxu0
      %v2393 = vadd.f32 %v2048, %v2392
      %v2394 = vpop.f32.mrf.mxu0
      %v2395 = vpop.f32.mrf.mxu0
      %v2396 = vadd.f32 %v2051, %v2395
      %v2397 = vpop.f32.mrf.mxu0
      %2398 = vmatprep.mubr.bf16.mxu0 0
      %2399 = vmatmul.mubr.bf16.gmra.mxu0 %v1928
      %v2400 = vpop.f32.mrf.mxu0
      %v2401 = vadd.f32 %v2056, %v2400
      %v2402 = vpop.f32.mrf.mxu0
      %v2403 = vpop.f32.mrf.mxu0
      %v2404 = vadd.f32 %v2059, %v2403
      %v2405 = vpop.f32.mrf.mxu0
      %2406 = vmatprep.mubr.bf16.mxu0 0
      %2407 = vmatmul.mubr.bf16.gmra.mxu0 %v1930
      %v2408 = vpop.f32.mrf.mxu0
      %v2409 = vadd.f32 %v2064, %v2408
      %v2410 = vpop.f32.mrf.mxu0
      %v2411 = vpop.f32.mrf.mxu0
      %v2412 = vadd.f32 %v2067, %v2411
      %v2413 = vpop.f32.mrf.mxu0
      %2414 = vmatprep.mubr.bf16.mxu0 0
      %2415 = vmatmul.mubr.bf16.gmra.mxu0 %v1932
      %v2416 = vpop.f32.mrf.mxu0
      %v2417 = vadd.f32 %v2072, %v2416
      %v2418 = vpop.f32.mrf.mxu0
      %v2419 = vpop.f32.mrf.mxu0
      %v2420 = vadd.f32 %v2075, %v2419
      %v2421 = vpop.f32.mrf.mxu0
      %2422 = vmatprep.mubr.bf16.mxu0 0
      %2423 = vmatmul.mubr.bf16.gmra.mxu0 %v1934
      %v2424 = vpop.f32.mrf.mxu0
      %v2425 = vadd.f32 %v2080, %v2424
      %v2426 = vpop.f32.mrf.mxu0
      %v2427 = vpop.f32.mrf.mxu0
      %v2428 = vadd.f32 %v2083, %v2427
      %v2429 = vpop.f32.mrf.mxu0
      %2430 = vmatprep.mubr.bf16.mxu0 0
      %2431 = vmatmul.mubr.bf16.gmra.mxu0 %v1936
      %v2432 = vpop.f32.mrf.mxu0
      %v2433 = vadd.f32 %v2088, %v2432
      %v2434 = vpop.f32.mrf.mxu0
      %v2435 = vpop.f32.mrf.mxu0
      %v2436 = vadd.f32 %v2091, %v2435
      %v2437 = vpop.f32.mrf.mxu0
      %2438 = vdwg.mxu0
      %v2439 = vadd.f32 %v2313, %v2152
      %v2440 = vadd.f32 %v2316, %v2155
      %v2441 = vadd.f32 %v2321, %v2160
      %v2442 = vadd.f32 %v2324, %v2163
      %v2443 = vadd.f32 %v2329, %v2168
      %v2444 = vadd.f32 %v2332, %v2171
      %v2445 = vadd.f32 %v2337, %v2176
      %v2446 = vadd.f32 %v2340, %v2179
      %v2447 = vadd.f32 %v2345, %v2184
      %v2448 = vadd.f32 %v2348, %v2187
      %v2449 = vadd.f32 %v2353, %v2192
      %v2450 = vadd.f32 %v2356, %v2195
      %v2451 = vadd.f32 %v2361, %v2200
      %v2452 = vadd.f32 %v2364, %v2203
      %v2453 = vadd.f32 %v2369, %v2208
      %v2454 = vadd.f32 %v2372, %v2211
      %v2455 = vadd.f32 %v2377, %v2216
      %v2456 = vadd.f32 %v2380, %v2219
      %v2457 = vadd.f32 %v2385, %v2224
      %v2458 = vadd.f32 %v2388, %v2227
      %v2459 = vadd.f32 %v2393, %v2232
      %v2460 = vadd.f32 %v2396, %v2235
      %v2461 = vadd.f32 %v2401, %v2240
      %v2462 = vadd.f32 %v2404, %v2243
      %v2463 = vadd.f32 %v2409, %v2248
      %v2464 = vadd.f32 %v2412, %v2251
      %v2465 = vadd.f32 %v2417, %v2256
      %v2466 = vadd.f32 %v2420, %v2259
      %v2467 = vadd.f32 %v2425, %v2264
      %v2468 = vadd.f32 %v2428, %v2267
      %v2469 = vadd.f32 %v2433, %v2256
      %v2470 = vadd.f32 %v2436, %v2259
      %v2471 = vsel %vm549, %v2439, 0.0
      %v2472 = vsel %vm549, %v2440, 0.0
      %v2473 = vadd.f32 %v2471, %v2472
      %v2474 = vsel %vm549, %v2441, 0.0
      %v2475 = vadd.f32 %v2473, %v2474
      %v2476 = vsel %vm549, %v2442, 0.0
      %v2477 = vadd.f32 %v2475, %v2476
      %v2478 = vsel %vm549, %v2443, 0.0
      %v2479 = vadd.f32 %v2477, %v2478
      %v2480 = vsel %vm549, %v2444, 0.0
      %v2481 = vadd.f32 %v2479, %v2480
      %v2482 = vsel %vm549, %v2445, 0.0
      %v2483 = vadd.f32 %v2481, %v2482
      %v2484 = vsel %vm549, %v2446, 0.0
      %v2485 = vadd.f32 %v2483, %v2484
      %v2486 = vsel %vm549, %v2447, 0.0
      %v2487 = vadd.f32 %v2485, %v2486
      %v2488 = vsel %vm549, %v2448, 0.0
      %v2489 = vadd.f32 %v2487, %v2488
      %v2490 = vsel %vm549, %v2449, 0.0
      %v2491 = vadd.f32 %v2489, %v2490
      %v2492 = vsel %vm549, %v2450, 0.0
      %v2493 = vadd.f32 %v2491, %v2492
      %v2494 = vsel %vm549, %v2451, 0.0
      %v2495 = vadd.f32 %v2493, %v2494
      %v2496 = vsel %vm549, %v2452, 0.0
      %v2497 = vadd.f32 %v2495, %v2496
      %v2498 = vsel %vm549, %v2453, 0.0
      %v2499 = vadd.f32 %v2497, %v2498
      %v2500 = vsel %vm549, %v2454, 0.0
      %v2501 = vadd.f32 %v2499, %v2500
      %v2502 = vsel %vm549, %v2455, 0.0
      %v2503 = vadd.f32 %v2501, %v2502
      %v2504 = vsel %vm549, %v2456, 0.0
      %v2505 = vadd.f32 %v2503, %v2504
      %v2506 = vsel %vm549, %v2457, 0.0
      %v2507 = vadd.f32 %v2505, %v2506
      %v2508 = vsel %vm549, %v2458, 0.0
      %v2509 = vadd.f32 %v2507, %v2508
      %v2510 = vsel %vm549, %v2459, 0.0
      %v2511 = vadd.f32 %v2509, %v2510
      %v2512 = vsel %vm549, %v2460, 0.0
      %v2513 = vadd.f32 %v2511, %v2512
      %v2514 = vsel %vm549, %v2461, 0.0
      %v2515 = vadd.f32 %v2513, %v2514
      %v2516 = vsel %vm549, %v2462, 0.0
      %v2517 = vadd.f32 %v2515, %v2516
      %v2518 = vsel %vm549, %v2463, 0.0
      %v2519 = vadd.f32 %v2517, %v2518
      %v2520 = vsel %vm549, %v2464, 0.0
      %v2521 = vadd.f32 %v2519, %v2520
      %v2522 = vsel %vm549, %v2465, 0.0
      %v2523 = vadd.f32 %v2521, %v2522
      %v2524 = vsel %vm549, %v2466, 0.0
      %v2525 = vadd.f32 %v2523, %v2524
      %v2526 = vsel %vm549, %v2467, 0.0
      %v2527 = vadd.f32 %v2525, %v2526
      %v2528 = vsel %vm549, %v2468, 0.0
      %v2529 = vadd.f32 %v2527, %v2528
      %v2530 = vsel %vm549, %v2469, 0.0
      %v2531 = vadd.f32 %v2529, %v2530
      %v2532 = vsel %vm549, %v2470, 0.0
      %v2533 = vadd.f32 %v2531, %v2532
      %v2534 = vrot.slane %v2533, 4
      %v2535 = vadd.f32 %v2533, %v2534
      %v2536 = vrot.slane %v2535, 2
      %v2537 = vadd.f32 %v2535, %v2536
      %v2538 = vrot.slane %v2537, 1
      %v2539 = vadd.f32 %v2537, %v2538
      %v2540 = vmul.f32 %v2539, 0.00390625
      %v2541 = vmul.f32 %v2439, %v2439
      %v2542 = vmul.f32 %v2440, %v2440
      %v2543 = vmul.f32 %v2441, %v2441
      %v2544 = vmul.f32 %v2442, %v2442
      %v2545 = vmul.f32 %v2443, %v2443
      %v2546 = vmul.f32 %v2444, %v2444
      %v2547 = vmul.f32 %v2445, %v2445
      %v2548 = vmul.f32 %v2446, %v2446
      %v2549 = vmul.f32 %v2447, %v2447
      %v2550 = vmul.f32 %v2448, %v2448
      %v2551 = vmul.f32 %v2449, %v2449
      %v2552 = vmul.f32 %v2450, %v2450
      %v2553 = vmul.f32 %v2451, %v2451
      %v2554 = vmul.f32 %v2452, %v2452
      %v2555 = vmul.f32 %v2453, %v2453
      %v2556 = vmul.f32 %v2454, %v2454
      %v2557 = vmul.f32 %v2455, %v2455
      %v2558 = vmul.f32 %v2456, %v2456
      %v2559 = vmul.f32 %v2457, %v2457
      %v2560 = vmul.f32 %v2458, %v2458
      %v2561 = vmul.f32 %v2459, %v2459
      %v2562 = vmul.f32 %v2460, %v2460
      %v2563 = vmul.f32 %v2461, %v2461
      %v2564 = vmul.f32 %v2462, %v2462
      %v2565 = vmul.f32 %v2463, %v2463
      %v2566 = vmul.f32 %v2464, %v2464
      %v2567 = vmul.f32 %v2465, %v2465
      %v2568 = vmul.f32 %v2466, %v2466
      %v2569 = vmul.f32 %v2467, %v2467
      %v2570 = vmul.f32 %v2468, %v2468
      %v2571 = vmul.f32 %v2469, %v2469
      %v2572 = vmul.f32 %v2470, %v2470
      %v2573 = vsel %vm549, %v2541, 0.0
      %v2574 = vsel %vm549, %v2542, 0.0
      %v2575 = vadd.f32 %v2573, %v2574
      %v2576 = vsel %vm549, %v2543, 0.0
      %v2577 = vadd.f32 %v2575, %v2576
      %v2578 = vsel %vm549, %v2544, 0.0
      %v2579 = vadd.f32 %v2577, %v2578
      %v2580 = vsel %vm549, %v2545, 0.0
      %v2581 = vadd.f32 %v2579, %v2580
      %v2582 = vsel %vm549, %v2546, 0.0
      %v2583 = vadd.f32 %v2581, %v2582
      %v2584 = vsel %vm549, %v2547, 0.0
      %v2585 = vadd.f32 %v2583, %v2584
      %v2586 = vsel %vm549, %v2548, 0.0
      %v2587 = vadd.f32 %v2585, %v2586
      %v2588 = vsel %vm549, %v2549, 0.0
      %v2589 = vadd.f32 %v2587, %v2588
      %v2590 = vsel %vm549, %v2550, 0.0
      %v2591 = vadd.f32 %v2589, %v2590
      %v2592 = vsel %vm549, %v2551, 0.0
      %v2593 = vadd.f32 %v2591, %v2592
      %v2594 = vsel %vm549, %v2552, 0.0
      %v2595 = vadd.f32 %v2593, %v2594
      %v2596 = vsel %vm549, %v2553, 0.0
      %v2597 = vadd.f32 %v2595, %v2596
      %v2598 = vsel %vm549, %v2554, 0.0
      %v2599 = vadd.f32 %v2597, %v2598
      %v2600 = vsel %vm549, %v2555, 0.0
      %v2601 = vadd.f32 %v2599, %v2600
      %v2602 = vsel %vm549, %v2556, 0.0
      %v2603 = vadd.f32 %v2601, %v2602
      %v2604 = vsel %vm549, %v2557, 0.0
      %v2605 = vadd.f32 %v2603, %v2604
      %v2606 = vsel %vm549, %v2558, 0.0
      %v2607 = vadd.f32 %v2605, %v2606
      %v2608 = vsel %vm549, %v2559, 0.0
      %v2609 = vadd.f32 %v2607, %v2608
      %v2610 = vsel %vm549, %v2560, 0.0
      %v2611 = vadd.f32 %v2609, %v2610
      %v2612 = vsel %vm549, %v2561, 0.0
      %v2613 = vadd.f32 %v2611, %v2612
      %v2614 = vsel %vm549, %v2562, 0.0
      %v2615 = vadd.f32 %v2613, %v2614
      %v2616 = vsel %vm549, %v2563, 0.0
      %v2617 = vadd.f32 %v2615, %v2616
      %v2618 = vsel %vm549, %v2564, 0.0
      %v2619 = vadd.f32 %v2617, %v2618
      %v2620 = vsel %vm549, %v2565, 0.0
      %v2621 = vadd.f32 %v2619, %v2620
      %v2622 = vsel %vm549, %v2566, 0.0
      %v2623 = vadd.f32 %v2621, %v2622
      %v2624 = vsel %vm549, %v2567, 0.0
      %v2625 = vadd.f32 %v2623, %v2624
      %v2626 = vsel %vm549, %v2568, 0.0
      %v2627 = vadd.f32 %v2625, %v2626
      %v2628 = vsel %vm549, %v2569, 0.0
      %v2629 = vadd.f32 %v2627, %v2628
      %v2630 = vsel %vm549, %v2570, 0.0
      %v2631 = vadd.f32 %v2629, %v2630
      %v2632 = vsel %vm549, %v2571, 0.0
      %v2633 = vadd.f32 %v2631, %v2632
      %v2634 = vsel %vm549, %v2572, 0.0
      %v2635 = vadd.f32 %v2633, %v2634
      %v2636 = vrot.slane %v2635, 4
      %v2637 = vadd.f32 %v2635, %v2636
      %v2638 = vrot.slane %v2637, 2
      %v2639 = vadd.f32 %v2637, %v2638
      %v2640 = vrot.slane %v2639, 1
      %v2641 = vadd.f32 %v2639, %v2640
      %v2642 = vmul.f32 %v2641, 0.00390625
      %v2643 = vmul.f32 %v2540, %v2540
      %v2644 = vsub.f32 %v2642, %v2643
      %v2645 = vsub.f32 %v2439, %v2540
      %v2646 = vsub.f32 %v2440, %v2540
      %v2647 = vsub.f32 %v2441, %v2540
      %v2648 = vsub.f32 %v2442, %v2540
      %v2649 = vsub.f32 %v2443, %v2540
      %v2650 = vsub.f32 %v2444, %v2540
      %v2651 = vsub.f32 %v2445, %v2540
      %v2652 = vsub.f32 %v2446, %v2540
      %v2653 = vsub.f32 %v2447, %v2540
      %v2654 = vsub.f32 %v2448, %v2540
      %v2655 = vsub.f32 %v2449, %v2540
      %v2656 = vsub.f32 %v2450, %v2540
      %v2657 = vsub.f32 %v2451, %v2540
      %v2658 = vsub.f32 %v2452, %v2540
      %v2659 = vsub.f32 %v2453, %v2540
      %v2660 = vsub.f32 %v2454, %v2540
      %v2661 = vsub.f32 %v2455, %v2540
      %v2662 = vsub.f32 %v2456, %v2540
      %v2663 = vsub.f32 %v2457, %v2540
      %v2664 = vsub.f32 %v2458, %v2540
      %v2665 = vsub.f32 %v2459, %v2540
      %v2666 = vsub.f32 %v2460, %v2540
      %v2667 = vsub.f32 %v2461, %v2540
      %v2668 = vsub.f32 %v2462, %v2540
      %v2669 = vsub.f32 %v2463, %v2540
      %v2670 = vsub.f32 %v2464, %v2540
      %v2671 = vsub.f32 %v2465, %v2540
      %v2672 = vsub.f32 %v2466, %v2540
      %v2673 = vsub.f32 %v2467, %v2540
      %v2674 = vsub.f32 %v2468, %v2540
      %v2675 = vsub.f32 %v2469, %v2540
      %v2676 = vsub.f32 %v2470, %v2540
      %v2677 = vadd.f32 %v2644, 1e-05
      %v2678 = vrsqrt.pop %v2677
      %v2679 = vmul.f32 %v2645, %v2678
      %v2680 = vmul.f32 %v2646, %v2678
      %v2681 = vmul.f32 %v2647, %v2678
      %v2682 = vmul.f32 %v2648, %v2678
      %v2683 = vmul.f32 %v2649, %v2678
      %v2684 = vmul.f32 %v2650, %v2678
      %v2685 = vmul.f32 %v2651, %v2678
      %v2686 = vmul.f32 %v2652, %v2678
      %v2687 = vmul.f32 %v2653, %v2678
      %v2688 = vmul.f32 %v2654, %v2678
      %v2689 = vmul.f32 %v2655, %v2678
      %v2690 = vmul.f32 %v2656, %v2678
      %v2691 = vmul.f32 %v2657, %v2678
      %v2692 = vmul.f32 %v2658, %v2678
      %v2693 = vmul.f32 %v2659, %v2678
      %v2694 = vmul.f32 %v2660, %v2678
      %v2695 = vmul.f32 %v2661, %v2678
      %v2696 = vmul.f32 %v2662, %v2678
      %v2697 = vmul.f32 %v2663, %v2678
      %v2698 = vmul.f32 %v2664, %v2678
      %v2699 = vmul.f32 %v2665, %v2678
      %v2700 = vmul.f32 %v2666, %v2678
      %v2701 = vmul.f32 %v2667, %v2678
      %v2702 = vmul.f32 %v2668, %v2678
      %v2703 = vmul.f32 %v2669, %v2678
      %v2704 = vmul.f32 %v2670, %v2678
      %v2705 = vmul.f32 %v2671, %v2678
      %v2706 = vmul.f32 %v2672, %v2678
      %v2707 = vmul.f32 %v2673, %v2678
      %v2708 = vmul.f32 %v2674, %v2678
      %v2709 = vmul.f32 %v2675, %v2678
      %v2710 = vmul.f32 %v2676, %v2678
      %v2711 = vadd.f32 %v179, %v2679
      %v2712 = vadd.f32 %v180, %v2680
      %v2713 = vadd.f32 %v181, %v2681
      %v2714 = vadd.f32 %v182, %v2682
      %v2715 = vadd.f32 %v183, %v2683
      %v2716 = vadd.f32 %v184, %v2684
      %v2717 = vadd.f32 %v185, %v2685
      %v2718 = vadd.f32 %v186, %v2686
      %v2719 = vadd.f32 %v187, %v2687
      %v2720 = vadd.f32 %v188, %v2688
      %v2721 = vadd.f32 %v189, %v2689
      %v2722 = vadd.f32 %v190, %v2690
      %v2723 = vadd.f32 %v191, %v2691
      %v2724 = vadd.f32 %v192, %v2692
      %v2725 = vadd.f32 %v193, %v2693
      %v2726 = vadd.f32 %v194, %v2694
      %v2727 = vadd.f32 %v195, %v2695
      %v2728 = vadd.f32 %v196, %v2696
      %v2729 = vadd.f32 %v197, %v2697
      %v2730 = vadd.f32 %v198, %v2698
      %v2731 = vadd.f32 %v199, %v2699
      %v2732 = vadd.f32 %v200, %v2700
      %v2733 = vadd.f32 %v201, %v2701
      %v2734 = vadd.f32 %v202, %v2702
      %v2735 = vadd.f32 %v203, %v2703
      %v2736 = vadd.f32 %v204, %v2704
      %v2737 = vadd.f32 %v205, %v2705
      %v2738 = vadd.f32 %v206, %v2706
      %v2739 = vadd.f32 %v207, %v2707
      %v2740 = vadd.f32 %v208, %v2708
      %v2741 = vadd.f32 %v209, %v2709
      %v2742 = vadd.f32 %v210, %v2710
      %2743 = vst.msk [vmem:[%s170] sm:$0xff] %vm549, %v2711
      %2744 = vst.msk [vmem:[%s170 + $0x8] sm:$0xff] %vm549, %v2712
      %2745 = vst.msk [vmem:[%s170 + $0x10] sm:$0xff] %vm549, %v2713
      %2746 = vst.msk [vmem:[%s170 + $0x18] sm:$0xff] %vm549, %v2714
      %2747 = vst.msk [vmem:[%s170 + $0x20] sm:$0xff] %vm549, %v2715
      %2748 = vst.msk [vmem:[%s170 + $0x28] sm:$0xff] %vm549, %v2716
      %2749 = vst.msk [vmem:[%s170 + $0x30] sm:$0xff] %vm549, %v2717
      %2750 = vst.msk [vmem:[%s170 + $0x38] sm:$0xff] %vm549, %v2718
      %2751 = vst.msk [vmem:[%s170 + $0x40] sm:$0xff] %vm549, %v2719
      %2752 = vst.msk [vmem:[%s170 + $0x48] sm:$0xff] %vm549, %v2720
      %2753 = vst.msk [vmem:[%s170 + $0x50] sm:$0xff] %vm549, %v2721
      %2754 = vst.msk [vmem:[%s170 + $0x58] sm:$0xff] %vm549, %v2722
      %2755 = vst.msk [vmem:[%s170 + $0x60] sm:$0xff] %vm549, %v2723
      %2756 = vst.msk [vmem:[%s170 + $0x68] sm:$0xff] %vm549, %v2724
      %2757 = vst.msk [vmem:[%s170 + $0x70] sm:$0xff] %vm549, %v2725
      %2758 = vst.msk [vmem:[%s170 + $0x78] sm:$0xff] %vm549, %v2726
      %2759 = vst.msk [vmem:[%s170 + $0x80] sm:$0xff] %vm549, %v2727
      %2760 = vst.msk [vmem:[%s170 + $0x88] sm:$0xff] %vm549, %v2728
      %2761 = vst.msk [vmem:[%s170 + $0x90] sm:$0xff] %vm549, %v2729
      %2762 = vst.msk [vmem:[%s170 + $0x98] sm:$0xff] %vm549, %v2730
      %2763 = vst.msk [vmem:[%s170 + $0xa0] sm:$0xff] %vm549, %v2731
      %2764 = vst.msk [vmem:[%s170 + $0xa8] sm:$0xff] %vm549, %v2732
      %2765 = vst.msk [vmem:[%s170 + $0xb0] sm:$0xff] %vm549, %v2733
      %2766 = vst.msk [vmem:[%s170 + $0xb8] sm:$0xff] %vm549, %v2734
      %2767 = vst.msk [vmem:[%s170 + $0xc0] sm:$0xff] %vm549, %v2735
      %2768 = vst.msk [vmem:[%s170 + $0xc8] sm:$0xff] %vm549, %v2736
      %2769 = vst.msk [vmem:[%s170 + $0xd0] sm:$0xff] %vm549, %v2737
      %2770 = vst.msk [vmem:[%s170 + $0xd8] sm:$0xff] %vm549, %v2738
      %2771 = vst.msk [vmem:[%s170 + $0xe0] sm:$0xff] %vm549, %v2739
      %2772 = vst.msk [vmem:[%s170 + $0xe8] sm:$0xff] %vm549, %v2740
      %2773 = vst.msk [vmem:[%s170 + $0xf0] sm:$0xff] %vm549, %v2741
      %2774 = vst.msk [vmem:[%s170 + $0xf8] sm:$0xff] %vm549, %v2742
      %p2775 = scmp.lt.s32.totalorder %s14, 1
      %s2776 = scalar_select %p2775, %s14, 1
      %s2777 = smul.addr %s2776, 32
      %s2778 = smul.addr %s2777, 8
      %s2779 = scalar_lea.vmem %s3, %s2778
      // Predicated region
      $region33: #{residual_block_pallas.1} parent=31 // pred_check
        %p2780 = pneg %p100
      $region34: #{residual_block_pallas.1} parent=31 // pred_check_branch
        %2782 = sbr.rel (%p2780) target = $region36
      $region35: #{residual_block_pallas.1} parent=31 // pred_region
        _
      $region36: #{residual_block_pallas.1} parent=31 // pred_fallthru
        _
    $region32: #{residual_block_pallas.1} parent=5 // pred_fallthru
      _
    %p2783 = scmp.le.s32.totalorder 2, %s9
    // Predicated region
    $region37: #{residual_block_pallas.1} parent=5 // pred_check
      %p2784 = pneg %p2783
    $region38: #{residual_block_pallas.1} parent=5 // pred_check_branch
      %2786 = sbr.rel (%p2784) target = $region40
    $region39: #{residual_block_pallas.1} parent=5 // pred_region
      %s2787 = ssub.s32 %s9, 2
      // Predicated region
      $region41: #{residual_block_pallas.1} parent=39 // pred_check
        %p2788 = pneg %p106
      $region42: #{residual_block_pallas.1} parent=39 // pred_check_branch
        %2790 = sbr.rel (%p2788) target = $region44
      $region43: #{residual_block_pallas.1} parent=39 // pred_region
        %p2791 = scmp.lt.s32.totalorder %s15, 1
        %s2792 = scalar_select %p2791, %s15, 1
        %s2793 = smul.addr %s2792, 32
        %s2794 = smul.addr %s2793, 8
        %s2795 = scalar_lea.vmem %s3, %s2794
      $region44: #{residual_block_pallas.1} parent=39 // pred_fallthru
        _
    $region40: #{residual_block_pallas.1} parent=5 // pred_fallthru
      _
  $region6: #{residual_block_pallas.1} parent=0 // loop_footer
    %s13 = sadd.s32 1, %s9
  $region7: #{residual_block_pallas.1} parent=0 // loop_footer_branch
    %8 = sbr.rel target = $region3
  $region8: #{residual_block_pallas.1} parent=0 // loop_exit
    _

</llo_original>
